<compile_context>
chip_gen: v7x
topology: tpu7x:2x2x1
jax: 0.10.0
libtpu: 0.0.40
codegen_flags: <defaults>
</compile_context>

<pallas_src>
import functools

import jax
import jax.numpy as jnp
import numpy as np
from jax import lax
from jax.experimental import pallas as pl
from jax.experimental.pallas import tpu as pltpu

EPS = 1e-5
_PAD = 128      # leading / trailing zero blocks of the batch-folded buffers


def _round_up(x, m):
    return (x + m - 1) // m * m


def _vmem_spec():
    return pl.BlockSpec(memory_space=pltpu.MemorySpace.VMEM)


def _conv3(src_ref, w_ref, nv):
    """'same' conv (k=3, pad=1) over the batch-folded buffer.

    src_ref: (C, nv + 2*_PAD) padded activations (pad columns are zero).
    w_ref  : (Cout, 3*C) tap-stacked weights, column index = d*C + c.
    Returns (Cout, nv) f32 accumulator (no bias).
    """
    c = src_ref.shape[0]
    lo = _PAD - 1
    f32 = jnp.float32
    if (c % 8 == 0) and (3 * c <= 256):
        # Stack the 3 taps along the contraction dim -> single MXU matmul.
        rhs = jnp.concatenate(
            [src_ref[:, lo + d:lo + d + nv] for d in range(3)], axis=0)
        return jnp.dot(w_ref[...], rhs, preferred_element_type=f32)
    # Fallback: 3 matmuls with the merged-channel contraction.
    acc = jnp.dot(w_ref[:, 0:c], src_ref[:, lo:lo + nv],
                  preferred_element_type=f32)
    acc = acc + jnp.dot(w_ref[:, c:2 * c], src_ref[:, lo + 1:lo + 1 + nv],
                        preferred_element_type=f32)
    acc = acc + jnp.dot(w_ref[:, 2 * c:3 * c], src_ref[:, lo + 2:lo + 2 + nv],
                        preferred_element_type=f32)
    return acc


def _decoder_kernel(xrep_ref, skip_ref, wup_ref, bup_ref,
                    w1_ref, b1_ref, g1_ref, be1_ref,
                    w2_ref, b2_ref, g2_ref, be2_ref,
                    o_ref, cat_s, h1_s,
                    *, B, Lskip, Lseg, pad_l, Lup):
    f32 = jnp.float32
    Cout, Nv = o_ref.shape
    Ntot = cat_s.shape[1]
    inv_count = 1.0 / float(B * Lskip)

    # ---- ConvTranspose1d(k=2, s=2) + F.pad via lane-parity where-merge -----
    # xrep_ref holds x column-repeated by 2, already placed at the padded up
    # positions of the batch-folded geometry (zeros elsewhere).
    xr = xrep_ref[...]
    a0 = jnp.dot(wup_ref[0], xr, preferred_element_type=f32)   # phase k = 0
    a1 = jnp.dot(wup_ref[1], xr, preferred_element_type=f32)   # phase k = 1
    col = lax.broadcasted_iota(jnp.int32, (1, Ntot), 1)
    pos = (col - _PAD) % Lseg
    in_up = ((col >= _PAD) & (col < _PAD + Nv)
             & (pos >= pad_l) & (pos < pad_l + Lup))
    even = ((pos - pad_l) % 2) == 0
    up = jnp.where(even, a0, a1) + bup_ref[...]
    up = jnp.where(in_up, up, 0.0)

    # ---- implicit channel concat: up -> rows [0,Cout), skip -> [Cout,2Cout) -
    cat_s[0:Cout, :] = up.astype(cat_s.dtype)
    cat_s[Cout:2 * Cout, :] = skip_ref[...]

    # ---- conv1 (k=3, pad=1) -------------------------------------------------
    acc1 = _conv3(cat_s, w1_ref, Nv) + b1_ref[...]

    # ---- BN1 (training batch stats over valid columns) + ReLU ---------------
    vcol = lax.broadcasted_iota(jnp.int32, (1, Nv), 1)
    vmask = ((vcol % Lseg) < Lskip).astype(f32)          # 1 on real columns
    mean1 = jnp.sum(acc1 * vmask, axis=1, keepdims=True) * inv_count
    d1 = acc1 - mean1
    var1 = jnp.sum(d1 * d1 * vmask, axis=1, keepdims=True) * inv_count
    h1 = jnp.maximum(d1 * (lax.rsqrt(var1 + EPS) * g1_ref[...]) + be1_ref[...],
                     0.0) * vmask

    # re-pad h1 (leading / trailing blocks stay zero for conv2's taps)
    h1_s[:, 0:_PAD] = jnp.zeros((Cout, _PAD), h1_s.dtype)
    h1_s[:, _PAD + Nv:Ntot] = jnp.zeros((Cout, _PAD), h1_s.dtype)
    h1_s[:, _PAD:_PAD + Nv] = h1.astype(h1_s.dtype)

    # ---- conv2 (k=3, pad=1) -------------------------------------------------
    acc2 = _conv3(h1_s, w2_ref, Nv) + b2_ref[...]

    # ---- BN2 + ReLU, lane-dense output --------------------------------------
    mean2 = jnp.sum(acc2 * vmask, axis=1, keepdims=True) * inv_count
    d2 = acc2 - mean2
    var2 = jnp.sum(d2 * d2 * vmask, axis=1, keepdims=True) * inv_count
    out = jnp.maximum(d2 * (lax.rsqrt(var2 + EPS) * g2_ref[...]) + be2_ref[...],
                      0.0)
    o_ref[...] = (out * vmask).astype(o_ref.dtype)


def decoder_block_forward(x, skip, params, *, mxu_dtype=jnp.float32):
    """Forward pass of decoder_block (training-mode BatchNorm)."""
    B, Cin, Lin = map(int, x.shape)
    Cout = int(params["w_up"].shape[1])
    Lskip = int(skip.shape[2])
    Lup = 2 * Lin
    diff = Lskip - Lup
    if diff < 0:
        # TODO(synk): negative F.pad (cropping) path not implemented.
        raise ValueError("skip length must be >= upsampled length (2*Lin)")
    pad_l = diff // 2

    Lseg = _round_up(Lskip + 1, 128)       # 128-aligned per-batch segment
    Nv = B * Lseg                          # lane-dense batch-folded width
    Ntot = Nv + 2 * _PAD

    # ---- XLA-side layout prep (pad/transpose/repeat only) -------------------
    x_cm = jnp.transpose(x, (1, 0, 2))                         # (Cin, B, Lin)
    x_rep = jnp.repeat(x_cm, 2, axis=2)                        # (Cin, B, Lup)
    x_seg = jnp.pad(x_rep, ((0, 0), (0, 0), (pad_l, Lseg - pad_l - Lup)))
    xrep = jnp.pad(x_seg.reshape(Cin, Nv), ((0, 0), (_PAD, _PAD)))

    s_cm = jnp.transpose(skip, (1, 0, 2))                      # (Cout, B, Lskip)
    s_seg = jnp.pad(s_cm, ((0, 0), (0, 0), (0, Lseg - Lskip)))
    skip_fold = jnp.pad(s_seg.reshape(Cout, Nv), ((0, 0), (_PAD, _PAD)))

    # ---- weight re-layout ----------------------------------------------------
    wup = jnp.transpose(params["w_up"], (2, 1, 0))             # (2, Cout, Cin)
    w1s = jnp.transpose(params["w1"], (0, 2, 1)).reshape(Cout, 3 * 2 * Cout)
    w2s = jnp.transpose(params["w2"], (0, 2, 1)).reshape(Cout, 3 * Cout)
    _col = lambda v: v.reshape(-1, 1).astype(jnp.float32)

    md = mxu_dtype
    kern = functools.partial(_decoder_kernel, B=B, Lskip=Lskip, Lseg=Lseg,
                             pad_l=pad_l, Lup=Lup)

    out2d = pl.pallas_call(
        kern,
        out_shape=jax.ShapeDtypeStruct((Cout, Nv), jnp.float32),
        in_specs=[_vmem_spec()] * 12,
        out_specs=_vmem_spec(),
        scratch_shapes=[pltpu.VMEM((2 * Cout, Ntot), md),      # merged cat
                        pltpu.VMEM((Cout, Ntot), md)],         # padded h1
        compiler_params=pltpu.CompilerParams(
            vmem_limit_bytes=32 * 1024 * 1024),
    )(xrep.astype(md), skip_fold.astype(md), wup.astype(md),
      _col(params["b_up"]),
      w1s.astype(md), _col(params["b1"]), _col(params["g1"]), _col(params["be1"]),
      w2s.astype(md), _col(params["b2"]), _col(params["g2"]), _col(params["be2"]))

    out = out2d.reshape(Cout, B, Lseg)[:, :, :Lskip]
    return jnp.transpose(out, (1, 0, 2))                       # (B, Cout, Lskip)


# -----------------------------------------------------------------------------
# Pure-JAX reference (correctness check of the Pallas path).
# -----------------------------------------------------------------------------
def _conv1d_ref(x, w, b):
    y = jax.lax.conv_general_dilated(
        x, w, window_strides=(1,), padding=[(1, 1)],
        dimension_numbers=("NCH", "OIH", "NCH"))
    return y + b[None, :, None]


def _bn_relu_ref(x, g, be):
    m = jnp.mean(x, axis=(0, 2), keepdims=True)
    v = jnp.mean((x - m) ** 2, axis=(0, 2), keepdims=True)
    y = (x - m) * jax.lax.rsqrt(v + EPS) * g[None, :, None] + be[None, :, None]
    return jnp.maximum(y, 0.0)


def reference_forward(x, skip, p):
    B, _, Lin = x.shape
    Cout = p["w_up"].shape[1]
    # ConvTranspose1d k=2 stride=2: y[b,o,2l+k] = sum_c w[c,o,k] x[b,c,l] + b[o]
    y = jnp.einsum("bcl,cok->bolk", x, p["w_up"]).reshape(B, Cout, 2 * Lin)
    y = y + p["b_up"][None, :, None]
    diff = skip.shape[2] - y.shape[2]
    y = jnp.pad(y, ((0, 0), (0, 0), (diff // 2, diff - diff // 2)))
    cat = jnp.concatenate([y, skip], axis=1)
    h = _bn_relu_ref(_conv1d_ref(cat, p["w1"], p["b1"]), p["g1"], p["be1"])
    h = _bn_relu_ref(_conv1d_ref(h, p["w2"], p["b2"]), p["g2"], p["be2"])
    return h


def _make_params(key, in_c, out_c):
    ks = jax.random.split(key, 10)
    return {
        "w_up": jax.random.normal(ks[0], (in_c, out_c, 2), jnp.float32) * 0.2,
        "b_up": jax.random.normal(ks[1], (out_c,), jnp.float32) * 0.1,
        "w1":   jax.random.normal(ks[2], (out_c, 2 * out_c, 3), jnp.float32) * 0.2,
        "b1":   jax.random.normal(ks[3], (out_c,), jnp.float32) * 0.1,
        "g1":   1.0 + 0.1 * jax.random.normal(ks[4], (out_c,), jnp.float32),
        "be1":  0.1 * jax.random.normal(ks[5], (out_c,), jnp.float32),
        "w2":   jax.random.normal(ks[6], (out_c, out_c, 3), jnp.float32) * 0.2,
        "b2":   jax.random.normal(ks[7], (out_c,), jnp.float32) * 0.1,
        "g2":   1.0 + 0.1 * jax.random.normal(ks[8], (out_c,), jnp.float32),
        "be2":  0.1 * jax.random.normal(ks[9], (out_c,), jnp.float32),
    }


if __name__ == "__main__":
    key = jax.random.PRNGKey(0)
    k_p, k_x, k_s, k_p2, k_x2, k_s2 = jax.random.split(key, 6)

    # Case 1: standard U-Net decoder (skip length == upsampled length).
    B, in_c, out_c, Lin = 2, 8, 4, 8
    Lskip = 2 * Lin
    params = _make_params(k_p, in_c, out_c)
    x = jax.random.normal(k_x, (B, in_c, Lin), jnp.float32)
    skip = jax.random.normal(k_s, (B, out_c, Lskip), jnp.float32)

    out = jax.block_until_ready(decoder_block_forward(x, skip, params))
    ref = jax.block_until_ready(reference_forward(x, skip, params))
    assert out.shape == (B, out_c, Lskip)
    assert np.allclose(np.asarray(out), np.asarray(ref), rtol=1e-4, atol=1e-4), \
        "Pallas decoder_block output mismatch vs JAX reference (case 1)"

    # Case 2: skip longer than the upsample -> exercises the F.pad placement.
    Lskip2 = 2 * Lin + 2
    params2 = _make_params(k_p2, in_c, out_c)
    x2 = jax.random.normal(k_x2, (B, in_c, Lin), jnp.float32)
    skip2 = jax.random.normal(k_s2, (B, out_c, Lskip2), jnp.float32)

    out2 = jax.block_until_ready(decoder_block_forward(x2, skip2, params2))
    ref2 = jax.block_until_ready(reference_forward(x2, skip2, params2))
    assert out2.shape == (B, out_c, Lskip2)
    assert np.allclose(np.asarray(out2), np.asarray(ref2), rtol=1e-4, atol=1e-4), \
        "Pallas decoder_block output mismatch vs JAX reference (case 2)"

    print("KERNEL_OK")
</pallas_src>

<mosaic_0001>
module attributes {stable_mosaic.version = 11 : i64} {
  func.func @_decoder_kernel(%arg0: memref<8x512xf32, #tpu.memory_space<vmem>>, %arg1: memref<4x512xf32, #tpu.memory_space<vmem>>, %arg2: memref<2x4x8xf32, #tpu.memory_space<vmem>>, %arg3: memref<4x1xf32, #tpu.memory_space<vmem>>, %arg4: memref<4x24xf32, #tpu.memory_space<vmem>>, %arg5: memref<4x1xf32, #tpu.memory_space<vmem>>, %arg6: memref<4x1xf32, #tpu.memory_space<vmem>>, %arg7: memref<4x1xf32, #tpu.memory_space<vmem>>, %arg8: memref<4x12xf32, #tpu.memory_space<vmem>>, %arg9: memref<4x1xf32, #tpu.memory_space<vmem>>, %arg10: memref<4x1xf32, #tpu.memory_space<vmem>>, %arg11: memref<4x1xf32, #tpu.memory_space<vmem>>, %arg12: memref<4x256xf32, #tpu.memory_space<vmem>>, %arg13: memref<8x512xf32, #tpu.memory_space<vmem>>, %arg14: memref<4x512xf32, #tpu.memory_space<vmem>>) attributes {dimension_semantics = [], scalar_prefetch = 0 : i64, scratch_operands = 2 : i64, tpu.core_type = #tpu.core_type<tc>} {
    %c0 = arith.constant 0 : index
    %c0_0 = arith.constant 0 : index
    %0 = vector.load %arg0[%c0, %c0_0] : memref<8x512xf32, #tpu.memory_space<vmem>>, vector<8x512xf32>
    %c0_1 = arith.constant 0 : index
    %c0_2 = arith.constant 0 : index
    %c0_3 = arith.constant 0 : index
    %1 = vector.load %arg2[%c0_1, %c0_2, %c0_3] : memref<2x4x8xf32, #tpu.memory_space<vmem>>, vector<1x4x8xf32>
    %2 = vector.shape_cast %1 : vector<1x4x8xf32> to vector<4x8xf32>
    %cst = arith.constant dense<0.000000e+00> : vector<4x512xf32>
    %3 = tpu.matmul %2, %0, %cst {dimension_numbers = #tpu.dot_dimension_numbers<[1], [0], [0], [1], [0, 0, 1, 1], [], []>} : vector<4x8xf32>, vector<8x512xf32>, vector<4x512xf32> -> vector<4x512xf32>
    %c1 = arith.constant 1 : index
    %c0_4 = arith.constant 0 : index
    %c0_5 = arith.constant 0 : index
    %4 = vector.load %arg2[%c1, %c0_4, %c0_5] : memref<2x4x8xf32, #tpu.memory_space<vmem>>, vector<1x4x8xf32>
    %5 = vector.shape_cast %4 : vector<1x4x8xf32> to vector<4x8xf32>
    %cst_6 = arith.constant dense<0.000000e+00> : vector<4x512xf32>
    %6 = tpu.matmul %5, %0, %cst_6 {dimension_numbers = #tpu.dot_dimension_numbers<[1], [0], [0], [1], [0, 0, 1, 1], [], []>} : vector<4x8xf32>, vector<8x512xf32>, vector<4x512xf32> -> vector<4x512xf32>
    %7 = tpu.iota {dimensions = array<i32: 1>} : vector<1x512xi32>
    %c128_i32 = arith.constant 128 : i32
    %8 = vector.broadcast %c128_i32 : i32 to vector<1x512xi32>
    %9 = arith.subi %7, %8 : vector<1x512xi32>
    %c128_i32_7 = arith.constant 128 : i32
    %c0_i32 = arith.constant 0 : i32
    %10 = arith.cmpi eq, %c128_i32_7, %c0_i32 : i32
    %c1_i32 = arith.constant 1 : i32
    %11 = arith.select %10, %c1_i32, %c128_i32_7 : i32
    %12 = vector.broadcast %11 : i32 to vector<1x512xi32>
    %13 = arith.remsi %9, %12 : vector<1x512xi32>
    %c0_i32_8 = arith.constant 0 : i32
    %14 = vector.broadcast %c0_i32_8 : i32 to vector<1x512xi32>
    %15 = arith.cmpi ne, %13, %14 : vector<1x512xi32>
    %c0_i32_9 = arith.constant 0 : i32
    %16 = vector.broadcast %c0_i32_9 : i32 to vector<1x512xi32>
    %17 = arith.cmpi slt, %13, %16 : vector<1x512xi32>
    %c0_i32_10 = arith.constant 0 : i32
    %18 = arith.cmpi slt, %11, %c0_i32_10 : i32
    %19 = vector.broadcast %18 : i1 to vector<1x512xi1>
    %20 = vector.broadcast %19 : vector<1x512xi1> to vector<1x512xi1>
    %21 = arith.xori %17, %20 : vector<1x512xi1>
    %22 = arith.andi %21, %15 : vector<1x512xi1>
    %23 = vector.broadcast %11 : i32 to vector<1x512xi32>
    %24 = arith.addi %13, %23 : vector<1x512xi32>
    %25 = arith.select %22, %24, %13 : vector<1x512xi1>, vector<1x512xi32>
    %c128_i32_11 = arith.constant 128 : i32
    %26 = vector.broadcast %c128_i32_11 : i32 to vector<1x512xi32>
    %27 = arith.cmpi sge, %7, %26 : vector<1x512xi32>
    %c384_i32 = arith.constant 384 : i32
    %28 = vector.broadcast %c384_i32 : i32 to vector<1x512xi32>
    %29 = arith.cmpi slt, %7, %28 : vector<1x512xi32>
    %30 = arith.andi %27, %29 : vector<1x512xi1>
    %c0_i32_12 = arith.constant 0 : i32
    %31 = vector.broadcast %c0_i32_12 : i32 to vector<1x512xi32>
    %32 = arith.cmpi sge, %25, %31 : vector<1x512xi32>
    %33 = arith.andi %30, %32 : vector<1x512xi1>
    %c16_i32 = arith.constant 16 : i32
    %34 = vector.broadcast %c16_i32 : i32 to vector<1x512xi32>
    %35 = arith.cmpi slt, %25, %34 : vector<1x512xi32>
    %36 = arith.andi %33, %35 : vector<1x512xi1>
    %c0_i32_13 = arith.constant 0 : i32
    %37 = vector.broadcast %c0_i32_13 : i32 to vector<1x512xi32>
    %38 = arith.subi %25, %37 : vector<1x512xi32>
    %c2_i32 = arith.constant 2 : i32
    %c0_i32_14 = arith.constant 0 : i32
    %39 = arith.cmpi eq, %c2_i32, %c0_i32_14 : i32
    %c1_i32_15 = arith.constant 1 : i32
    %40 = arith.select %39, %c1_i32_15, %c2_i32 : i32
    %41 = vector.broadcast %40 : i32 to vector<1x512xi32>
    %42 = arith.remsi %38, %41 : vector<1x512xi32>
    %c0_i32_16 = arith.constant 0 : i32
    %43 = vector.broadcast %c0_i32_16 : i32 to vector<1x512xi32>
    %44 = arith.cmpi ne, %42, %43 : vector<1x512xi32>
    %c0_i32_17 = arith.constant 0 : i32
    %45 = vector.broadcast %c0_i32_17 : i32 to vector<1x512xi32>
    %46 = arith.cmpi slt, %42, %45 : vector<1x512xi32>
    %c0_i32_18 = arith.constant 0 : i32
    %47 = arith.cmpi slt, %40, %c0_i32_18 : i32
    %48 = vector.broadcast %47 : i1 to vector<1x512xi1>
    %49 = vector.broadcast %48 : vector<1x512xi1> to vector<1x512xi1>
    %50 = arith.xori %46, %49 : vector<1x512xi1>
    %51 = arith.andi %50, %44 : vector<1x512xi1>
    %52 = vector.broadcast %40 : i32 to vector<1x512xi32>
    %53 = arith.addi %42, %52 : vector<1x512xi32>
    %54 = arith.select %51, %53, %42 : vector<1x512xi1>, vector<1x512xi32>
    %c0_i32_19 = arith.constant 0 : i32
    %55 = vector.broadcast %c0_i32_19 : i32 to vector<1x512xi32>
    %56 = arith.cmpi eq, %54, %55 : vector<1x512xi32>
    %57 = vector.shape_cast %56 : vector<1x512xi1> to vector<1x512xi1>
    %58 = vector.broadcast %57 : vector<1x512xi1> to vector<4x512xi1>
    %59 = arith.select %58, %3, %6 : vector<4x512xi1>, vector<4x512xf32>
    %c0_20 = arith.constant 0 : index
    %c0_21 = arith.constant 0 : index
    %60 = vector.load %arg3[%c0_20, %c0_21] : memref<4x1xf32, #tpu.memory_space<vmem>>, vector<4x1xf32>
    %61 = vector.broadcast %60 : vector<4x1xf32> to vector<4x512xf32>
    %62 = arith.addf %59, %61 : vector<4x512xf32>
    %cst_22 = arith.constant 0.000000e+00 : f32
    %63 = vector.shape_cast %36 : vector<1x512xi1> to vector<1x512xi1>
    %64 = vector.broadcast %63 : vector<1x512xi1> to vector<4x512xi1>
    %65 = vector.broadcast %cst_22 : f32 to vector<4x512xf32>
    %66 = arith.select %64, %62, %65 : vector<4x512xi1>, vector<4x512xf32>
    %c0_23 = arith.constant 0 : index
    %c0_24 = arith.constant 0 : index
    %67 = vector.load %arg13[%c0_23, %c0_24] : memref<8x512xf32, #tpu.memory_space<vmem>>, vector<4x512xf32>
    tpu.vector_store %arg13[%c0_23, %c0_24], %66 {strides = array<i32>} : memref<8x512xf32, #tpu.memory_space<vmem>>, vector<4x512xf32>,
    %c0_25 = arith.constant 0 : index
    %c0_26 = arith.constant 0 : index
    %68 = vector.load %arg1[%c0_25, %c0_26] : memref<4x512xf32, #tpu.memory_space<vmem>>, vector<4x512xf32>
    %c4 = arith.constant 4 : index
    %c0_27 = arith.constant 0 : index
    %69 = vector.load %arg13[%c4, %c0_27] : memref<8x512xf32, #tpu.memory_space<vmem>>, vector<4x512xf32>
    tpu.vector_store %arg13[%c4, %c0_27], %68 {strides = array<i32>} : memref<8x512xf32, #tpu.memory_space<vmem>>, vector<4x512xf32>,
    %c0_28 = arith.constant 0 : index
    %c127 = arith.constant 127 : index
    %70 = vector.load %arg13[%c0_28, %c127] : memref<8x512xf32, #tpu.memory_space<vmem>>, vector<8x256xf32>
    %c0_29 = arith.constant 0 : index
    %c128 = arith.constant 128 : index
    %71 = vector.load %arg13[%c0_29, %c128] : memref<8x512xf32, #tpu.memory_space<vmem>>, vector<8x256xf32>
    %c0_30 = arith.constant 0 : index
    %c129 = arith.constant 129 : index
    %72 = vector.load %arg13[%c0_30, %c129] : memref<8x512xf32, #tpu.memory_space<vmem>>, vector<8x256xf32>
    %73 = tpu.concatenate %70, %71, %72 in 0 : vector<8x256xf32>, vector<8x256xf32>, vector<8x256xf32> -> vector<24x256xf32>
    %c0_31 = arith.constant 0 : index
    %c0_32 = arith.constant 0 : index
    %74 = vector.load %arg4[%c0_31, %c0_32] : memref<4x24xf32, #tpu.memory_space<vmem>>, vector<4x24xf32>
    %cst_33 = arith.constant dense<0.000000e+00> : vector<4x256xf32>
    %75 = tpu.matmul %74, %73, %cst_33 {dimension_numbers = #tpu.dot_dimension_numbers<[1], [0], [0], [1], [0, 0, 1, 1], [], []>} : vector<4x24xf32>, vector<24x256xf32>, vector<4x256xf32> -> vector<4x256xf32>
    %c0_34 = arith.constant 0 : index
    %c0_35 = arith.constant 0 : index
    %76 = vector.load %arg5[%c0_34, %c0_35] : memref<4x1xf32, #tpu.memory_space<vmem>>, vector<4x1xf32>
    %77 = vector.broadcast %76 : vector<4x1xf32> to vector<4x256xf32>
    %78 = arith.addf %75, %77 : vector<4x256xf32>
    %79 = tpu.iota {dimensions = array<i32: 1>} : vector<1x256xi32>
    %c128_i32_36 = arith.constant 128 : i32
    %c0_i32_37 = arith.constant 0 : i32
    %80 = arith.cmpi eq, %c128_i32_36, %c0_i32_37 : i32
    %c1_i32_38 = arith.constant 1 : i32
    %81 = arith.select %80, %c1_i32_38, %c128_i32_36 : i32
    %82 = vector.broadcast %81 : i32 to vector<1x256xi32>
    %83 = arith.remsi %79, %82 : vector<1x256xi32>
    %c0_i32_39 = arith.constant 0 : i32
    %84 = vector.broadcast %c0_i32_39 : i32 to vector<1x256xi32>
    %85 = arith.cmpi ne, %83, %84 : vector<1x256xi32>
    %c0_i32_40 = arith.constant 0 : i32
    %86 = vector.broadcast %c0_i32_40 : i32 to vector<1x256xi32>
    %87 = arith.cmpi slt, %83, %86 : vector<1x256xi32>
    %c0_i32_41 = arith.constant 0 : i32
    %88 = arith.cmpi slt, %81, %c0_i32_41 : i32
    %89 = vector.broadcast %88 : i1 to vector<1x256xi1>
    %90 = vector.broadcast %89 : vector<1x256xi1> to vector<1x256xi1>
    %91 = arith.xori %87, %90 : vector<1x256xi1>
    %92 = arith.andi %91, %85 : vector<1x256xi1>
    %93 = vector.broadcast %81 : i32 to vector<1x256xi32>
    %94 = arith.addi %83, %93 : vector<1x256xi32>
    %95 = arith.select %92, %94, %83 : vector<1x256xi1>, vector<1x256xi32>
    %c16_i32_42 = arith.constant 16 : i32
    %96 = vector.broadcast %c16_i32_42 : i32 to vector<1x256xi32>
    %97 = arith.cmpi slt, %95, %96 : vector<1x256xi32>
    %98 = arith.extui %97 : vector<1x256xi1> to vector<1x256xi32>
    %99 = arith.sitofp %98 : vector<1x256xi32> to vector<1x256xf32>
    %100 = vector.broadcast %99 : vector<1x256xf32> to vector<4x256xf32>
    %101 = arith.mulf %78, %100 : vector<4x256xf32>
    %cst_43 = arith.constant dense<0.000000e+00> : vector<4xf32>
    %102 = vector.multi_reduction <add>, %101, %cst_43 [1] : vector<4x256xf32> to vector<4xf32>
    %103 = vector.shape_cast %102 : vector<4xf32> to vector<4x1xf32>
    %cst_44 = arith.constant 3.125000e-02 : f32
    %104 = vector.broadcast %cst_44 : f32 to vector<4x1xf32>
    %105 = arith.mulf %103, %104 : vector<4x1xf32>
    %106 = vector.broadcast %105 : vector<4x1xf32> to vector<4x256xf32>
    %107 = arith.subf %78, %106 : vector<4x256xf32>
    %108 = arith.mulf %107, %107 : vector<4x256xf32>
    %109 = vector.broadcast %99 : vector<1x256xf32> to vector<4x256xf32>
    %110 = arith.mulf %108, %109 : vector<4x256xf32>
    %cst_45 = arith.constant dense<0.000000e+00> : vector<4xf32>
    %111 = vector.multi_reduction <add>, %110, %cst_45 [1] : vector<4x256xf32> to vector<4xf32>
    %112 = vector.shape_cast %111 : vector<4xf32> to vector<4x1xf32>
    %cst_46 = arith.constant 3.125000e-02 : f32
    %113 = vector.broadcast %cst_46 : f32 to vector<4x1xf32>
    %114 = arith.mulf %112, %113 : vector<4x1xf32>
    %cst_47 = arith.constant 9.99999974E-6 : f32
    %115 = vector.broadcast %cst_47 : f32 to vector<4x1xf32>
    %116 = arith.addf %114, %115 : vector<4x1xf32>
    %117 = math.rsqrt %116 : vector<4x1xf32>
    %c0_48 = arith.constant 0 : index
    %c0_49 = arith.constant 0 : index
    %118 = vector.load %arg6[%c0_48, %c0_49] : memref<4x1xf32, #tpu.memory_space<vmem>>, vector<4x1xf32>
    %119 = arith.mulf %117, %118 : vector<4x1xf32>
    %120 = vector.broadcast %119 : vector<4x1xf32> to vector<4x256xf32>
    %121 = arith.mulf %107, %120 : vector<4x256xf32>
    %c0_50 = arith.constant 0 : index
    %c0_51 = arith.constant 0 : index
    %122 = vector.load %arg7[%c0_50, %c0_51] : memref<4x1xf32, #tpu.memory_space<vmem>>, vector<4x1xf32>
    %123 = vector.broadcast %122 : vector<4x1xf32> to vector<4x256xf32>
    %124 = arith.addf %121, %123 : vector<4x256xf32>
    %cst_52 = arith.constant 0.000000e+00 : f32
    %125 = vector.broadcast %cst_52 : f32 to vector<4x256xf32>
    %126 = arith.maximumf %124, %125 : vector<4x256xf32>
    %127 = vector.broadcast %99 : vector<1x256xf32> to vector<4x256xf32>
    %128 = arith.mulf %126, %127 : vector<4x256xf32>
    %cst_53 = arith.constant 0.000000e+00 : f32
    %129 = vector.broadcast %cst_53 : f32 to vector<4x128xf32>
    %c0_54 = arith.constant 0 : index
    %c0_55 = arith.constant 0 : index
    %130 = vector.load %arg14[%c0_54, %c0_55] : memref<4x512xf32, #tpu.memory_space<vmem>>, vector<4x128xf32>
    tpu.vector_store %arg14[%c0_54, %c0_55], %129 {strides = array<i32>} : memref<4x512xf32, #tpu.memory_space<vmem>>, vector<4x128xf32>,
    %cst_56 = arith.constant 0.000000e+00 : f32
    %131 = vector.broadcast %cst_56 : f32 to vector<4x128xf32>
    %c0_57 = arith.constant 0 : index
    %c384 = arith.constant 384 : index
    %132 = vector.load %arg14[%c0_57, %c384] : memref<4x512xf32, #tpu.memory_space<vmem>>, vector<4x128xf32>
    tpu.vector_store %arg14[%c0_57, %c384], %131 {strides = array<i32>} : memref<4x512xf32, #tpu.memory_space<vmem>>, vector<4x128xf32>,
    %c0_58 = arith.constant 0 : index
    %c128_59 = arith.constant 128 : index
    %133 = vector.load %arg14[%c0_58, %c128_59] : memref<4x512xf32, #tpu.memory_space<vmem>>, vector<4x256xf32>
    tpu.vector_store %arg14[%c0_58, %c128_59], %128 {strides = array<i32>} : memref<4x512xf32, #tpu.memory_space<vmem>>, vector<4x256xf32>,
    %c0_60 = arith.constant 0 : index
    %c0_61 = arith.constant 0 : index
    %134 = vector.load %arg8[%c0_60, %c0_61] : memref<4x12xf32, #tpu.memory_space<vmem>>, vector<4x4xf32>
    %c0_62 = arith.constant 0 : index
    %c127_63 = arith.constant 127 : index
    %135 = vector.load %arg14[%c0_62, %c127_63] : memref<4x512xf32, #tpu.memory_space<vmem>>, vector<4x256xf32>
    %cst_64 = arith.constant dense<0.000000e+00> : vector<4x256xf32>
    %136 = tpu.matmul %134, %135, %cst_64 {dimension_numbers = #tpu.dot_dimension_numbers<[1], [0], [0], [1], [0, 0, 1, 1], [], []>} : vector<4x4xf32>, vector<4x256xf32>, vector<4x256xf32> -> vector<4x256xf32>
    %c0_65 = arith.constant 0 : index
    %c4_66 = arith.constant 4 : index
    %137 = vector.load %arg8[%c0_65, %c4_66] : memref<4x12xf32, #tpu.memory_space<vmem>>, vector<4x4xf32>
    %c0_67 = arith.constant 0 : index
    %c128_68 = arith.constant 128 : index
    %138 = vector.load %arg14[%c0_67, %c128_68] : memref<4x512xf32, #tpu.memory_space<vmem>>, vector<4x256xf32>
    %cst_69 = arith.constant dense<0.000000e+00> : vector<4x256xf32>
    %139 = tpu.matmul %137, %138, %cst_69 {dimension_numbers = #tpu.dot_dimension_numbers<[1], [0], [0], [1], [0, 0, 1, 1], [], []>} : vector<4x4xf32>, vector<4x256xf32>, vector<4x256xf32> -> vector<4x256xf32>
    %140 = arith.addf %136, %139 : vector<4x256xf32>
    %c0_70 = arith.constant 0 : index
    %c8 = arith.constant 8 : index
    %141 = vector.load %arg8[%c0_70, %c8] : memref<4x12xf32, #tpu.memory_space<vmem>>, vector<4x4xf32>
    %c0_71 = arith.constant 0 : index
    %c129_72 = arith.constant 129 : index
    %142 = vector.load %arg14[%c0_71, %c129_72] : memref<4x512xf32, #tpu.memory_space<vmem>>, vector<4x256xf32>
    %cst_73 = arith.constant dense<0.000000e+00> : vector<4x256xf32>
    %143 = tpu.matmul %141, %142, %cst_73 {dimension_numbers = #tpu.dot_dimension_numbers<[1], [0], [0], [1], [0, 0, 1, 1], [], []>} : vector<4x4xf32>, vector<4x256xf32>, vector<4x256xf32> -> vector<4x256xf32>
    %144 = arith.addf %140, %143 : vector<4x256xf32>
    %c0_74 = arith.constant 0 : index
    %c0_75 = arith.constant 0 : index
    %145 = vector.load %arg9[%c0_74, %c0_75] : memref<4x1xf32, #tpu.memory_space<vmem>>, vector<4x1xf32>
    %146 = vector.broadcast %145 : vector<4x1xf32> to vector<4x256xf32>
    %147 = arith.addf %144, %146 : vector<4x256xf32>
    %148 = vector.broadcast %99 : vector<1x256xf32> to vector<4x256xf32>
    %149 = arith.mulf %147, %148 : vector<4x256xf32>
    %cst_76 = arith.constant dense<0.000000e+00> : vector<4xf32>
    %150 = vector.multi_reduction <add>, %149, %cst_76 [1] : vector<4x256xf32> to vector<4xf32>
    %151 = vector.shape_cast %150 : vector<4xf32> to vector<4x1xf32>
    %cst_77 = arith.constant 3.125000e-02 : f32
    %152 = vector.broadcast %cst_77 : f32 to vector<4x1xf32>
    %153 = arith.mulf %151, %152 : vector<4x1xf32>
    %154 = vector.broadcast %153 : vector<4x1xf32> to vector<4x256xf32>
    %155 = arith.subf %147, %154 : vector<4x256xf32>
    %156 = arith.mulf %155, %155 : vector<4x256xf32>
    %157 = vector.broadcast %99 : vector<1x256xf32> to vector<4x256xf32>
    %158 = arith.mulf %156, %157 : vector<4x256xf32>
    %cst_78 = arith.constant dense<0.000000e+00> : vector<4xf32>
    %159 = vector.multi_reduction <add>, %158, %cst_78 [1] : vector<4x256xf32> to vector<4xf32>
    %160 = vector.shape_cast %159 : vector<4xf32> to vector<4x1xf32>
    %cst_79 = arith.constant 3.125000e-02 : f32
    %161 = vector.broadcast %cst_79 : f32 to vector<4x1xf32>
    %162 = arith.mulf %160, %161 : vector<4x1xf32>
    %cst_80 = arith.constant 9.99999974E-6 : f32
    %163 = vector.broadcast %cst_80 : f32 to vector<4x1xf32>
    %164 = arith.addf %162, %163 : vector<4x1xf32>
    %165 = math.rsqrt %164 : vector<4x1xf32>
    %c0_81 = arith.constant 0 : index
    %c0_82 = arith.constant 0 : index
    %166 = vector.load %arg10[%c0_81, %c0_82] : memref<4x1xf32, #tpu.memory_space<vmem>>, vector<4x1xf32>
    %167 = arith.mulf %165, %166 : vector<4x1xf32>
    %168 = vector.broadcast %167 : vector<4x1xf32> to vector<4x256xf32>
    %169 = arith.mulf %155, %168 : vector<4x256xf32>
    %c0_83 = arith.constant 0 : index
    %c0_84 = arith.constant 0 : index
    %170 = vector.load %arg11[%c0_83, %c0_84] : memref<4x1xf32, #tpu.memory_space<vmem>>, vector<4x1xf32>
    %171 = vector.broadcast %170 : vector<4x1xf32> to vector<4x256xf32>
    %172 = arith.addf %169, %171 : vector<4x256xf32>
    %cst_85 = arith.constant 0.000000e+00 : f32
    %173 = vector.broadcast %cst_85 : f32 to vector<4x256xf32>
    %174 = arith.maximumf %172, %173 : vector<4x256xf32>
    %175 = vector.broadcast %99 : vector<1x256xf32> to vector<4x256xf32>
    %176 = arith.mulf %174, %175 : vector<4x256xf32>
    %c0_86 = arith.constant 0 : index
    %c0_87 = arith.constant 0 : index
    %177 = vector.load %arg12[%c0_86, %c0_87] : memref<4x256xf32, #tpu.memory_space<vmem>>, vector<4x256xf32>
    tpu.vector_store %arg12[%c0_86, %c0_87], %176 {strides = array<i32>} : memref<4x256xf32, #tpu.memory_space<vmem>>, vector<4x256xf32>,
    return
  }
}

</mosaic_0001>

<llo_original>
// kernel: tpu_custom_call.1
$region0: #{tpu_custom_call.1}
  #allocation0 [shape = 'u32[]', space=smem, size = 0x4, offset = 0x4, fixed_abs, tag = 'smem constant byte address 0x4 - core index']
  #allocation1 [shape = 'u32[144,128]{1,0:T(1,128)}', space=vmem, size = 0x12000, scoped, tag = 'internal scratch']
  #allocation2 [shape = 'f32[8,512]{1,0:T(8,128)}', space=vmem, size = 0x4000, scoped, tag = 'scratch operand']
  #allocation3 [shape = 'f32[4,512]{1,0:T(4,128)}', space=vmem, size = 0x2000, scoped, tag = 'scratch operand']
  %s0 = inlined_call_operand.vmem [shape: f32[8,512], index: 0, kind: input, shape index: {}]
  %s1 = inlined_call_operand.hbm [shape: f32[4,512], index: 1, kind: input, shape index: {}]
  %s2 = inlined_call_operand.vmem [shape: f32[2,4,8], index: 2, kind: input, shape index: {}]
  %s3 = inlined_call_operand.vmem [shape: f32[4,1], index: 3, kind: input, shape index: {}]
  %s4 = inlined_call_operand.vmem [shape: f32[4,24], index: 4, kind: input, shape index: {}]
  %s5 = inlined_call_operand.vmem [shape: f32[4,1], index: 5, kind: input, shape index: {}]
  %s6 = inlined_call_operand.vmem [shape: f32[4,1], index: 6, kind: input, shape index: {}]
  %s7 = inlined_call_operand.vmem [shape: f32[4,1], index: 7, kind: input, shape index: {}]
  %s8 = inlined_call_operand.vmem [shape: f32[4,12], index: 8, kind: input, shape index: {}]
  %s9 = inlined_call_operand.vmem [shape: f32[4,1], index: 9, kind: input, shape index: {}]
  %s10 = inlined_call_operand.vmem [shape: f32[4,1], index: 10, kind: input, shape index: {}]
  %s11 = inlined_call_operand.vmem [shape: f32[4,1], index: 11, kind: input, shape index: {}]
  %s12 = inlined_call_operand.hbm [shape: f32[4,256], index: 12, kind: output, shape index: {}]
  %s13 = sld [smem:[#allocation0]]
  $region62: #{tpu_custom_call.1} parent=0
    _
  %s15 = ssub.s32 1, %s13
  %s16 = scalar_select 0, %s15, %s13
  $region1: #{tpu_custom_call.1} parent=0
    #allocation4 [shape = 'u8[8192]{0}', space=vmem, size = 0x2000, scoped, tag = 'input window, operand 1, single buffered']
    #allocation5 [shape = 's32[1]{0}', space=sflag, size = 0x4, scoped, tag = 'scoped memory for tpu_custom_call.1']
    #allocation6 [shape = 's32[1]{0}', space=sflag, size = 0x4, scoped, tag = 'scoped memory for tpu_custom_call.1']
    #allocation7 [shape = 'u8[4096]{0}', space=vmem, size = 0x1000, scoped, tag = 'output window, operand 0, single buffered']
    %17 = vsyncpa [#allocation5], 0
    %18 = vsyncpa [#allocation6], 0
    // Predicated region
    $region2: #{tpu_custom_call.1} parent=1 // pred_check
      _
    $region3: #{tpu_custom_call.1} parent=1 // pred_check_branch
      %20 = sbr.rel (0) target = $region5
    $region4: #{tpu_custom_call.1} parent=1 // pred_region
      _
    $region5: #{tpu_custom_call.1} parent=1 // pred_fallthru
      _
    // Predicated region
    $region6: #{tpu_custom_call.1} parent=1 // pred_check
      _
    $region7: #{tpu_custom_call.1} parent=1 // pred_check_branch
      %22 = sbr.rel (0) target = $region9
    $region8: #{tpu_custom_call.1} parent=1 // pred_region
      %s24 = ssub.s32 256, 256
      %25 = vsyncadd [#allocation5], %s24
      %s27 = sshll.u32 [#allocation4], 4
      %s28 = int_to_ptr.vmem [resolvable:$true] %s27
      %30 = dma.hbm_to_vmem [thread:$0]  %s1, 256, %s28, [#allocation5]
    $region9: #{tpu_custom_call.1} parent=1 // pred_fallthru
      _
    // Predicated region
    $region10: #{tpu_custom_call.1} parent=1 // pred_check
      _
    $region11: #{tpu_custom_call.1} parent=1 // pred_check_branch
      %32 = sbr.rel (0) target = $region13
    $region12: #{tpu_custom_call.1} parent=1 // pred_region
      _
    $region13: #{tpu_custom_call.1} parent=1 // pred_fallthru
      _
    // Predicated region
    $region14: #{tpu_custom_call.1} parent=1 // pred_check
      _
    $region15: #{tpu_custom_call.1} parent=1 // pred_check_branch
      %34 = sbr.rel (0) target = $region17
    $region16: #{tpu_custom_call.1} parent=1 // pred_region
      _
    $region17: #{tpu_custom_call.1} parent=1 // pred_fallthru
      _
    // Predicated region
    $region18: #{tpu_custom_call.1} parent=1 // pred_check
      _
    $region19: #{tpu_custom_call.1} parent=1 // pred_check_branch
      %36 = sbr.rel (0) target = $region21
    $region20: #{tpu_custom_call.1} parent=1 // pred_region
      _
    $region21: #{tpu_custom_call.1} parent=1 // pred_fallthru
      _
    // Predicated region
    $region22: #{tpu_custom_call.1} parent=1 // pred_check
      _
    $region23: #{tpu_custom_call.1} parent=1 // pred_check_branch
      %38 = sbr.rel (0) target = $region25
    $region24: #{tpu_custom_call.1} parent=1 // pred_region
      _
    $region25: #{tpu_custom_call.1} parent=1 // pred_fallthru
      _
    // Predicated region
    $region26: #{tpu_custom_call.1} parent=1 // pred_check
      _
    $region27: #{tpu_custom_call.1} parent=1 // pred_check_branch
      %40 = sbr.rel (0) target = $region29
    $region28: #{tpu_custom_call.1} parent=1 // pred_region
      _
    $region29: #{tpu_custom_call.1} parent=1 // pred_fallthru
      _
    // Predicated region
    $region30: #{tpu_custom_call.1} parent=1 // pred_check
      _
    $region31: #{tpu_custom_call.1} parent=1 // pred_check_branch
      %42 = sbr.rel (0) target = $region33
    $region32: #{tpu_custom_call.1} parent=1 // pred_region
      _
    $region33: #{tpu_custom_call.1} parent=1 // pred_fallthru
      _
    // Predicated region
    $region34: #{tpu_custom_call.1} parent=1 // pred_check
      _
    $region35: #{tpu_custom_call.1} parent=1 // pred_check_branch
      %44 = sbr.rel (0) target = $region37
    $region36: #{tpu_custom_call.1} parent=1 // pred_region
      _
    $region37: #{tpu_custom_call.1} parent=1 // pred_fallthru
      _
    // Predicated region
    $region38: #{tpu_custom_call.1} parent=1 // pred_check
      _
    $region39: #{tpu_custom_call.1} parent=1 // pred_check_branch
      %46 = sbr.rel (0) target = $region41
    $region40: #{tpu_custom_call.1} parent=1 // pred_region
      _
    $region41: #{tpu_custom_call.1} parent=1 // pred_fallthru
      _
    // Predicated region
    $region42: #{tpu_custom_call.1} parent=1 // pred_check
      _
    $region43: #{tpu_custom_call.1} parent=1 // pred_check_branch
      %48 = sbr.rel (0) target = $region45
    $region44: #{tpu_custom_call.1} parent=1 // pred_region
      _
    $region45: #{tpu_custom_call.1} parent=1 // pred_fallthru
      _
    // Predicated region
    $region46: #{tpu_custom_call.1} parent=1 // pred_check
      _
    $region47: #{tpu_custom_call.1} parent=1 // pred_check_branch
      %50 = sbr.rel (0) target = $region49
    $region48: #{tpu_custom_call.1} parent=1 // pred_region
      _
    $region49: #{tpu_custom_call.1} parent=1 // pred_fallthru
      _
    // Predicated region
    $region50: #{tpu_custom_call.1} parent=1 // pred_check
      _
    $region51: #{tpu_custom_call.1} parent=1 // pred_check_branch
      %52 = sbr.rel (0) target = $region53
    $region52: #{tpu_custom_call.1} parent=1 // pred_region
      %53 = dma.done [#allocation5], 256
    $region53: #{tpu_custom_call.1} parent=1 // pred_fallthru
      _
    %v54 = vld [vmem:[%s0] sm:$0xff]
    %v55 = vld [vmem:[%s0 + $0x8] sm:$0xff]
    %v56 = vld [vmem:[%s0 + $0x10] sm:$0xff]
    %v57 = vld [vmem:[%s0 + $0x18] sm:$0xff]
    %v58 = vld [vmem:[%s2] sm:$0xf]
    %vm59 = vcmask 64512
    %v61 = vsel %vm59, %v58, 0
    %63 = vmatprep.subr.mxu0 %v55
    %64 = vmatpush1.msra.mxu0 %v54
    %65 = vmatprep.subr.mxu0 0.0
    %66 = vmatpush1.msra.mxu0 0.0
    %67 = vmatprep.subr.mxu0 0.0
    %68 = vmatpush1.msra.mxu0 0.0
    %69 = vmatprep.subr.mxu0 0.0
    %70 = vmatpush1.msra.mxu0 0.0
    %71 = vmatprep.subr.mxu0 0.0
    %72 = vmatpush1.msra.mxu0 0.0
    %73 = vmatprep.subr.mxu0 0.0
    %74 = vmatpush1.msra.mxu0 0.0
    %75 = vmatprep.subr.mxu0 0.0
    %76 = vmatpush1.msra.mxu0 0.0
    %77 = vmatprep.subr.mxu0 0.0
    %78 = vmatpush1.msra.mxu0 0.0
    %79 = vmatprep.subr.mxu0 0.0
    %80 = vmatpush1.msra.mxu0 0.0
    %81 = vmatprep.subr.mxu0 0.0
    %82 = vmatpush1.msra.mxu0 0.0
    %83 = vmatprep.subr.mxu0 0.0
    %84 = vmatpush1.msra.mxu0 0.0
    %85 = vmatprep.subr.mxu0 0.0
    %86 = vmatpush1.msra.mxu0 0.0
    %87 = vmatprep.subr.mxu0 0.0
    %88 = vmatpush1.msra.mxu0 0.0
    %89 = vmatprep.subr.mxu0 0.0
    %90 = vmatpush1.msra.mxu0 0.0
    %91 = vmatprep.subr.mxu0 0.0
    %92 = vmatpush1.msra.mxu0 0.0
    %93 = vmatprep.subr.mxu0 0.0
    %94 = vmatpush1.msra.mxu0 0.0
    %95 = vmatprep.subr.mxu0 0.0
    %96 = vmatpush1.msra.mxu0 0.0
    %97 = vmatprep.subr.mxu0 0.0
    %98 = vmatpush1.msra.mxu0 0.0
    %99 = vmatprep.subr.mxu0 0.0
    %100 = vmatpush1.msra.mxu0 0.0
    %101 = vmatprep.subr.mxu0 0.0
    %102 = vmatpush1.msra.mxu0 0.0
    %103 = vmatprep.subr.mxu0 0.0
    %104 = vmatpush1.msra.mxu0 0.0
    %105 = vmatprep.subr.mxu0 0.0
    %106 = vmatpush1.msra.mxu0 0.0
    %107 = vmatprep.subr.mxu0 0.0
    %108 = vmatpush1.msra.mxu0 0.0
    %109 = vmatprep.subr.mxu0 0.0
    %110 = vmatpush1.msra.mxu0 0.0
    %111 = vmatprep.subr.mxu0 0.0
    %112 = vmatpush1.msra.mxu0 0.0
    %113 = vmatprep.subr.mxu0 0.0
    %114 = vmatpush1.msra.mxu0 0.0
    %115 = vmatprep.subr.mxu0 0.0
    %116 = vmatpush1.msra.mxu0 0.0
    %117 = vmatprep.subr.mxu0 0.0
    %118 = vmatpush1.msra.mxu0 0.0
    %119 = vmatprep.subr.mxu0 0.0
    %120 = vmatpush1.msra.mxu0 0.0
    %121 = vmatprep.subr.mxu0 0.0
    %122 = vmatpush1.msra.mxu0 0.0
    %123 = vmatprep.subr.mxu0 0.0
    %124 = vmatpush1.msra.mxu0 0.0
    %125 = vmatprep.subr.mxu0 0.0
    %126 = vmatpush1.msra.mxu0 0.0
    %127 = vmatprep.mubr.f32.mxu0 0.0
    %128 = vmatmul.mubr.f32.gmra.mrb[0].mxu0 %v61
    %v129 = vpop.f32.mrb[0].mxu0
    %v130 = vadd.f32 0.0, %v129
    %v131 = vpop.f32.mrb[0].mxu0
    %v132 = vadd.f32 0.0, %v131
    %133 = vdwg.mxu0
    %134 = vmatprep.subr.mxu0 %v57
    %135 = vmatpush1.msra.mxu0 %v56
    %136 = vmatprep.subr.mxu0 0.0
    %137 = vmatpush1.msra.mxu0 0.0
    %138 = vmatprep.subr.mxu0 0.0
    %139 = vmatpush1.msra.mxu0 0.0
    %140 = vmatprep.subr.mxu0 0.0
    %141 = vmatpush1.msra.mxu0 0.0
    %142 = vmatprep.subr.mxu0 0.0
    %143 = vmatpush1.msra.mxu0 0.0
    %144 = vmatprep.subr.mxu0 0.0
    %145 = vmatpush1.msra.mxu0 0.0
    %146 = vmatprep.subr.mxu0 0.0
    %147 = vmatpush1.msra.mxu0 0.0
    %148 = vmatprep.subr.mxu0 0.0
    %149 = vmatpush1.msra.mxu0 0.0
    %150 = vmatprep.subr.mxu0 0.0
    %151 = vmatpush1.msra.mxu0 0.0
    %152 = vmatprep.subr.mxu0 0.0
    %153 = vmatpush1.msra.mxu0 0.0
    %154 = vmatprep.subr.mxu0 0.0
    %155 = vmatpush1.msra.mxu0 0.0
    %156 = vmatprep.subr.mxu0 0.0
    %157 = vmatpush1.msra.mxu0 0.0
    %158 = vmatprep.subr.mxu0 0.0
    %159 = vmatpush1.msra.mxu0 0.0
    %160 = vmatprep.subr.mxu0 0.0
    %161 = vmatpush1.msra.mxu0 0.0
    %162 = vmatprep.subr.mxu0 0.0
    %163 = vmatpush1.msra.mxu0 0.0
    %164 = vmatprep.subr.mxu0 0.0
    %165 = vmatpush1.msra.mxu0 0.0
    %166 = vmatprep.subr.mxu0 0.0
    %167 = vmatpush1.msra.mxu0 0.0
    %168 = vmatprep.subr.mxu0 0.0
    %169 = vmatpush1.msra.mxu0 0.0
    %170 = vmatprep.subr.mxu0 0.0
    %171 = vmatpush1.msra.mxu0 0.0
    %172 = vmatprep.subr.mxu0 0.0
    %173 = vmatpush1.msra.mxu0 0.0
    %174 = vmatprep.subr.mxu0 0.0
    %175 = vmatpush1.msra.mxu0 0.0
    %176 = vmatprep.subr.mxu0 0.0
    %177 = vmatpush1.msra.mxu0 0.0
    %178 = vmatprep.subr.mxu0 0.0
    %179 = vmatpush1.msra.mxu0 0.0
    %180 = vmatprep.subr.mxu0 0.0
    %181 = vmatpush1.msra.mxu0 0.0
    %182 = vmatprep.subr.mxu0 0.0
    %183 = vmatpush1.msra.mxu0 0.0
    %184 = vmatprep.subr.mxu0 0.0
    %185 = vmatpush1.msra.mxu0 0.0
    %186 = vmatprep.subr.mxu0 0.0
    %187 = vmatpush1.msra.mxu0 0.0
    %188 = vmatprep.subr.mxu0 0.0
    %189 = vmatpush1.msra.mxu0 0.0
    %190 = vmatprep.subr.mxu0 0.0
    %191 = vmatpush1.msra.mxu0 0.0
    %192 = vmatprep.subr.mxu0 0.0
    %193 = vmatpush1.msra.mxu0 0.0
    %194 = vmatprep.subr.mxu0 0.0
    %195 = vmatpush1.msra.mxu0 0.0
    %196 = vmatprep.subr.mxu0 0.0
    %197 = vmatpush1.msra.mxu0 0.0
    %198 = vmatprep.mubr.f32.mxu0 0.0
    %199 = vmatmul.mubr.f32.gmra.mrb[0].mxu0 %v61
    %v200 = vpop.f32.mrb[0].mxu0
    %v201 = vadd.f32 0.0, %v200
    %v202 = vpop.f32.mrb[0].mxu0
    %v203 = vadd.f32 0.0, %v202
    %204 = vdwg.mxu0
    %s205 = scalar_lea.vmem %s2, 4
    %v206 = vld [vmem:[%s205] sm:$0xf]
    %v208 = vsel %vm59, %v206, 0
    %210 = vmatprep.subr.mxu0 %v55
    %211 = vmatpush1.msra.mxu0 %v54
    %212 = vmatprep.subr.mxu0 0.0
    %213 = vmatpush1.msra.mxu0 0.0
    %214 = vmatprep.subr.mxu0 0.0
    %215 = vmatpush1.msra.mxu0 0.0
    %216 = vmatprep.subr.mxu0 0.0
    %217 = vmatpush1.msra.mxu0 0.0
    %218 = vmatprep.subr.mxu0 0.0
    %219 = vmatpush1.msra.mxu0 0.0
    %220 = vmatprep.subr.mxu0 0.0
    %221 = vmatpush1.msra.mxu0 0.0
    %222 = vmatprep.subr.mxu0 0.0
    %223 = vmatpush1.msra.mxu0 0.0
    %224 = vmatprep.subr.mxu0 0.0
    %225 = vmatpush1.msra.mxu0 0.0
    %226 = vmatprep.subr.mxu0 0.0
    %227 = vmatpush1.msra.mxu0 0.0
    %228 = vmatprep.subr.mxu0 0.0
    %229 = vmatpush1.msra.mxu0 0.0
    %230 = vmatprep.subr.mxu0 0.0
    %231 = vmatpush1.msra.mxu0 0.0
    %232 = vmatprep.subr.mxu0 0.0
    %233 = vmatpush1.msra.mxu0 0.0
    %234 = vmatprep.subr.mxu0 0.0
    %235 = vmatpush1.msra.mxu0 0.0
    %236 = vmatprep.subr.mxu0 0.0
    %237 = vmatpush1.msra.mxu0 0.0
    %238 = vmatprep.subr.mxu0 0.0
    %239 = vmatpush1.msra.mxu0 0.0
    %240 = vmatprep.subr.mxu0 0.0
    %241 = vmatpush1.msra.mxu0 0.0
    %242 = vmatprep.subr.mxu0 0.0
    %243 = vmatpush1.msra.mxu0 0.0
    %244 = vmatprep.subr.mxu0 0.0
    %245 = vmatpush1.msra.mxu0 0.0
    %246 = vmatprep.subr.mxu0 0.0
    %247 = vmatpush1.msra.mxu0 0.0
    %248 = vmatprep.subr.mxu0 0.0
    %249 = vmatpush1.msra.mxu0 0.0
    %250 = vmatprep.subr.mxu0 0.0
    %251 = vmatpush1.msra.mxu0 0.0
    %252 = vmatprep.subr.mxu0 0.0
    %253 = vmatpush1.msra.mxu0 0.0
    %254 = vmatprep.subr.mxu0 0.0
    %255 = vmatpush1.msra.mxu0 0.0
    %256 = vmatprep.subr.mxu0 0.0
    %257 = vmatpush1.msra.mxu0 0.0
    %258 = vmatprep.subr.mxu0 0.0
    %259 = vmatpush1.msra.mxu0 0.0
    %260 = vmatprep.subr.mxu0 0.0
    %261 = vmatpush1.msra.mxu0 0.0
    %262 = vmatprep.subr.mxu0 0.0
    %263 = vmatpush1.msra.mxu0 0.0
    %264 = vmatprep.subr.mxu0 0.0
    %265 = vmatpush1.msra.mxu0 0.0
    %266 = vmatprep.subr.mxu0 0.0
    %267 = vmatpush1.msra.mxu0 0.0
    %268 = vmatprep.subr.mxu0 0.0
    %269 = vmatpush1.msra.mxu0 0.0
    %270 = vmatprep.subr.mxu0 0.0
    %271 = vmatpush1.msra.mxu0 0.0
    %272 = vmatprep.subr.mxu0 0.0
    %273 = vmatpush1.msra.mxu0 0.0
    %274 = vmatprep.mubr.f32.mxu0 0.0
    %275 = vmatmul.mubr.f32.gmra.mrb[0].mxu0 %v208
    %v276 = vpop.f32.mrb[0].mxu0
    %v277 = vadd.f32 0.0, %v276
    %v278 = vpop.f32.mrb[0].mxu0
    %v279 = vadd.f32 0.0, %v278
    %280 = vdwg.mxu0
    %281 = vmatprep.subr.mxu0 %v57
    %282 = vmatpush1.msra.mxu0 %v56
    %283 = vmatprep.subr.mxu0 0.0
    %284 = vmatpush1.msra.mxu0 0.0
    %285 = vmatprep.subr.mxu0 0.0
    %286 = vmatpush1.msra.mxu0 0.0
    %287 = vmatprep.subr.mxu0 0.0
    %288 = vmatpush1.msra.mxu0 0.0
    %289 = vmatprep.subr.mxu0 0.0
    %290 = vmatpush1.msra.mxu0 0.0
    %291 = vmatprep.subr.mxu0 0.0
    %292 = vmatpush1.msra.mxu0 0.0
    %293 = vmatprep.subr.mxu0 0.0
    %294 = vmatpush1.msra.mxu0 0.0
    %295 = vmatprep.subr.mxu0 0.0
    %296 = vmatpush1.msra.mxu0 0.0
    %297 = vmatprep.subr.mxu0 0.0
    %298 = vmatpush1.msra.mxu0 0.0
    %299 = vmatprep.subr.mxu0 0.0
    %300 = vmatpush1.msra.mxu0 0.0
    %301 = vmatprep.subr.mxu0 0.0
    %302 = vmatpush1.msra.mxu0 0.0
    %303 = vmatprep.subr.mxu0 0.0
    %304 = vmatpush1.msra.mxu0 0.0
    %305 = vmatprep.subr.mxu0 0.0
    %306 = vmatpush1.msra.mxu0 0.0
    %307 = vmatprep.subr.mxu0 0.0
    %308 = vmatpush1.msra.mxu0 0.0
    %309 = vmatprep.subr.mxu0 0.0
    %310 = vmatpush1.msra.mxu0 0.0
    %311 = vmatprep.subr.mxu0 0.0
    %312 = vmatpush1.msra.mxu0 0.0
    %313 = vmatprep.subr.mxu0 0.0
    %314 = vmatpush1.msra.mxu0 0.0
    %315 = vmatprep.subr.mxu0 0.0
    %316 = vmatpush1.msra.mxu0 0.0
    %317 = vmatprep.subr.mxu0 0.0
    %318 = vmatpush1.msra.mxu0 0.0
    %319 = vmatprep.subr.mxu0 0.0
    %320 = vmatpush1.msra.mxu0 0.0
    %321 = vmatprep.subr.mxu0 0.0
    %322 = vmatpush1.msra.mxu0 0.0
    %323 = vmatprep.subr.mxu0 0.0
    %324 = vmatpush1.msra.mxu0 0.0
    %325 = vmatprep.subr.mxu0 0.0
    %326 = vmatpush1.msra.mxu0 0.0
    %327 = vmatprep.subr.mxu0 0.0
    %328 = vmatpush1.msra.mxu0 0.0
    %329 = vmatprep.subr.mxu0 0.0
    %330 = vmatpush1.msra.mxu0 0.0
    %331 = vmatprep.subr.mxu0 0.0
    %332 = vmatpush1.msra.mxu0 0.0
    %333 = vmatprep.subr.mxu0 0.0
    %334 = vmatpush1.msra.mxu0 0.0
    %335 = vmatprep.subr.mxu0 0.0
    %336 = vmatpush1.msra.mxu0 0.0
    %337 = vmatprep.subr.mxu0 0.0
    %338 = vmatpush1.msra.mxu0 0.0
    %339 = vmatprep.subr.mxu0 0.0
    %340 = vmatpush1.msra.mxu0 0.0
    %341 = vmatprep.subr.mxu0 0.0
    %342 = vmatpush1.msra.mxu0 0.0
    %343 = vmatprep.subr.mxu0 0.0
    %344 = vmatpush1.msra.mxu0 0.0
    %345 = vmatprep.mubr.f32.mxu0 0.0
    %346 = vmatmul.mubr.f32.gmra.mrb[0].mxu0 %v208
    %v347 = vpop.f32.mrb[0].mxu0
    %v348 = vadd.f32 0.0, %v347
    %v349 = vpop.f32.mrb[0].mxu0
    %v350 = vadd.f32 0.0, %v349
    %351 = vdwg.mxu0
    %v352 = vlaneseq
    %v353 = vand.u32 %v352, 127
    %v354 = vadd.s32 %v353, 128
    %v355 = vadd.s32 %v353, 256
    %v356 = vadd.s32 %v353, 384
    %v357 = vsub.s32 %v353, 128
    %v358 = vsub.s32 %v355, 128
    %v359 = vsub.s32 %v356, 128
    %vm360 = vcmp.lt.s32.totalorder %v357, 0
    %v361 = vsub.s32 0, %v357
    %v362 = vsel %vm360, %v361, %v357
    %v363 = vshrl.u32 %v362, 7
    %v364 = vand.u32 %v362, 127
    %v365 = vsub.s32 0, %v364
    %v366 = vsel %vm360, %v365, %v364
    %vm367 = vcmp.lt.s32.totalorder %v353, 0
    %v368 = vsub.s32 0, %v353
    %v369 = vsel %vm367, %v368, %v353
    %v370 = vshrl.u32 %v369, 7
    %v371 = vand.u32 %v369, 127
    %v372 = vsub.s32 0, %v371
    %v373 = vsel %vm367, %v372, %v371
    %vm374 = vcmp.lt.s32.totalorder %v358, 0
    %v375 = vsub.s32 0, %v358
    %v376 = vsel %vm374, %v375, %v358
    %v377 = vshrl.u32 %v376, 7
    %v378 = vand.u32 %v376, 127
    %v379 = vsub.s32 0, %v378
    %v380 = vsel %vm374, %v379, %v378
    %vm381 = vcmp.lt.s32.totalorder %v359, 0
    %v382 = vsub.s32 0, %v359
    %v383 = vsel %vm381, %v382, %v359
    %v384 = vshrl.u32 %v383, 7
    %v385 = vand.u32 %v383, 127
    %v386 = vsub.s32 0, %v385
    %v387 = vsel %vm381, %v386, %v385
    %vm388 = vcmp.ne.s32.totalorder %v366, 0
    %vm389 = vcmp.ne.s32.totalorder %v373, 0
    %vm390 = vcmp.ne.s32.totalorder %v380, 0
    %vm391 = vcmp.ne.s32.totalorder %v387, 0
    %vm392 = vcmp.lt.s32.totalorder %v366, 0
    %vm393 = vcmp.lt.s32.totalorder %v373, 0
    %vm394 = vcmp.lt.s32.totalorder %v380, 0
    %vm395 = vcmp.lt.s32.totalorder %v387, 0
    %vm396 = vmand %vm392, %vm388
    %vm397 = vmand %vm393, %vm389
    %vm398 = vmand %vm394, %vm390
    %vm399 = vmand %vm395, %vm391
    %v400 = vadd.s32 %v366, 128
    %v401 = vadd.s32 %v373, 128
    %v402 = vadd.s32 %v380, 128
    %v403 = vadd.s32 %v387, 128
    %v404 = vsel %vm396, %v400, %v366
    %v405 = vsel %vm397, %v401, %v373
    %v406 = vsel %vm398, %v402, %v380
    %v407 = vsel %vm399, %v403, %v387
    %vm408 = vcmp.ge.s32.totalorder %v353, 128
    %vm409 = vcmp.ge.s32.totalorder %v354, 128
    %vm410 = vcmp.ge.s32.totalorder %v355, 128
    %vm411 = vcmp.ge.s32.totalorder %v356, 128
    %vm412 = vcmp.lt.s32.totalorder %v353, 384
    %vm413 = vcmp.lt.s32.totalorder %v354, 384
    %vm414 = vcmp.lt.s32.totalorder %v355, 384
    %vm415 = vcmp.lt.s32.totalorder %v356, 384
    %vm416 = vmand %vm408, %vm412
    %vm417 = vmand %vm409, %vm413
    %vm418 = vmand %vm410, %vm414
    %vm419 = vmand %vm411, %vm415
    %vm420 = vcmp.ge.s32.totalorder %v404, 0
    %vm421 = vcmp.ge.s32.totalorder %v405, 0
    %vm422 = vcmp.ge.s32.totalorder %v406, 0
    %vm423 = vcmp.ge.s32.totalorder %v407, 0
    %vm424 = vmand %vm416, %vm420
    %vm425 = vmand %vm417, %vm421
    %vm426 = vmand %vm418, %vm422
    %vm427 = vmand %vm419, %vm423
    %vm428 = vcmp.lt.s32.totalorder %v404, 16
    %vm429 = vcmp.lt.s32.totalorder %v405, 16
    %vm430 = vcmp.lt.s32.totalorder %v406, 16
    %vm431 = vcmp.lt.s32.totalorder %v407, 16
    %vm432 = vmand %vm424, %vm428
    %vm433 = vmand %vm425, %vm429
    %vm434 = vmand %vm426, %vm430
    %vm435 = vmand %vm427, %vm431
    %vm436 = vcmp.lt.s32.totalorder %v404, 0
    %v437 = vsub.s32 0, %v404
    %v438 = vsel %vm436, %v437, %v404
    %v439 = vshrl.u32 %v438, 1
    %v440 = vand.u32 %v438, 1
    %v441 = vsub.s32 0, %v440
    %v442 = vsel %vm436, %v441, %v440
    %vm443 = vcmp.lt.s32.totalorder %v405, 0
    %v444 = vsub.s32 0, %v405
    %v445 = vsel %vm443, %v444, %v405
    %v446 = vshrl.u32 %v445, 1
    %v447 = vand.u32 %v445, 1
    %v448 = vsub.s32 0, %v447
    %v449 = vsel %vm443, %v448, %v447
    %vm450 = vcmp.lt.s32.totalorder %v406, 0
    %v451 = vsub.s32 0, %v406
    %v452 = vsel %vm450, %v451, %v406
    %v453 = vshrl.u32 %v452, 1
    %v454 = vand.u32 %v452, 1
    %v455 = vsub.s32 0, %v454
    %v456 = vsel %vm450, %v455, %v454
    %vm457 = vcmp.lt.s32.totalorder %v407, 0
    %v458 = vsub.s32 0, %v407
    %v459 = vsel %vm457, %v458, %v407
    %v460 = vshrl.u32 %v459, 1
    %v461 = vand.u32 %v459, 1
    %v462 = vsub.s32 0, %v461
    %v463 = vsel %vm457, %v462, %v461
    %vm464 = vcmp.ne.s32.totalorder %v442, 0
    %vm465 = vcmp.ne.s32.totalorder %v449, 0
    %vm466 = vcmp.ne.s32.totalorder %v456, 0
    %vm467 = vcmp.ne.s32.totalorder %v463, 0
    %vm468 = vcmp.lt.s32.totalorder %v442, 0
    %vm469 = vcmp.lt.s32.totalorder %v449, 0
    %vm470 = vcmp.lt.s32.totalorder %v456, 0
    %vm471 = vcmp.lt.s32.totalorder %v463, 0
    %vm472 = vmand %vm468, %vm464
    %vm473 = vmand %vm469, %vm465
    %vm474 = vmand %vm470, %vm466
    %vm475 = vmand %vm471, %vm467
    %v476 = vadd.s32 %v442, 2
    %v477 = vadd.s32 %v449, 2
    %v478 = vadd.s32 %v456, 2
    %v479 = vadd.s32 %v463, 2
    %v480 = vsel %vm472, %v476, %v442
    %v481 = vsel %vm473, %v477, %v449
    %v482 = vsel %vm474, %v478, %v456
    %v483 = vsel %vm475, %v479, %v463
    %vm484 = vcmp.eq.s32.totalorder %v480, 0
    %vm485 = vcmp.eq.s32.totalorder %v481, 0
    %vm486 = vcmp.eq.s32.totalorder %v482, 0
    %vm487 = vcmp.eq.s32.totalorder %v483, 0
    %v488 = vsel %vm484, 1, 0
    %v489 = vsel %vm485, 1, 0
    %v490 = vsel %vm486, 1, 0
    %v491 = vsel %vm487, 1, 0
    %vm492 = vcmp.eq.s32.totalorder %v488, 1
    %vm493 = vcmp.eq.s32.totalorder %v489, 1
    %vm494 = vcmp.eq.s32.totalorder %v490, 1
    %vm495 = vcmp.eq.s32.totalorder %v491, 1
    %v496 = vsel %vm492, %v130, %v277
    %v497 = vsel %vm493, %v132, %v279
    %v498 = vsel %vm494, %v201, %v348
    %v499 = vsel %vm495, %v203, %v350
    %v500 = vld [vmem:[%s3] sm:$0xf]
    %502 = vset.pattern.permute.xlu0 0
    %503 = vperm.xlu0 %502, %v500
    %v504 = vpop.permute.xlu0 %503
    %v506 = vadd.f32 %v496, %v504
    %v507 = vadd.f32 %v497, %v504
    %v508 = vadd.f32 %v498, %v504
    %v509 = vadd.f32 %v499, %v504
    %v510 = vsel %vm432, 1, 0
    %v511 = vsel %vm433, 1, 0
    %v512 = vsel %vm434, 1, 0
    %v513 = vsel %vm435, 1, 0
    %vm514 = vcmp.eq.s32.totalorder %v510, 1
    %vm515 = vcmp.eq.s32.totalorder %v511, 1
    %vm516 = vcmp.eq.s32.totalorder %v512, 1
    %vm517 = vcmp.eq.s32.totalorder %v513, 1
    %v518 = vsel %vm514, %v506, 0.0
    %v519 = vsel %vm515, %v507, 0.0
    %v520 = vsel %vm516, %v508, 0.0
    %v521 = vsel %vm517, %v509, 0.0
    %522 = vst [vmem:[#allocation2] sm:$0xf] %v518
    %523 = vst [vmem:[#allocation2 + $0x8] sm:$0xf] %v519
    %524 = vst [vmem:[#allocation2 + $0x10] sm:$0xf] %v520
    %525 = vst [vmem:[#allocation2 + $0x18] sm:$0xf] %v521
    %v526 = vld [vmem:[#allocation4] sm:$0xff]
    %v527 = vld [vmem:[#allocation4 + $0x8] sm:$0xff]
    %v530 = vcombine.low %v526, %v526
    %v531 = vcombine.low %v527, %v527
    %534 = vst [vmem:[#allocation2] sm:$0xf0] %v530
    %535 = vst [vmem:[#allocation2 + $0x8] sm:$0xf0] %v526
    %536 = vst [vmem:[#allocation2 + $0x10] sm:$0xf0] %v531
    %537 = vst [vmem:[#allocation2 + $0x18] sm:$0xf0] %v527
    %v538 = vld [vmem:[#allocation2] sm:$0xff]
    %v539 = vld [vmem:[#allocation2 + $0x8] sm:$0xff]
    %v540 = vld [vmem:[#allocation2 + $0x10] sm:$0xff]
    %v541 = vld [vmem:[#allocation2 + $0x8] sm:$0xff]
    %v542 = vld [vmem:[#allocation2 + $0x10] sm:$0xff]
    %v543 = vld [vmem:[#allocation2 + $0x18] sm:$0xff]
    %546 = vrot.lane.b32.xlu0 %v539, 127
    %v547 = vpop.permute.xlu0 %546
    %548 = vrot.lane.b32.xlu0 %v540, 127
    %v549 = vpop.permute.xlu0 %548
    %vm550 = vcmask 1039360
    %v551 = vsel %vm550, %v547, %v549
    %555 = vrot.lane.b32.xlu0 %v541, 126
    %v556 = vpop.permute.xlu0 %555
    %557 = vrot.lane.b32.xlu0 %v542, 126
    %v558 = vpop.permute.xlu0 %557
    %559 = vrot.lane.b32.xlu0 %v543, 126
    %v560 = vpop.permute.xlu0 %559
    %vm561 = vcmask 1031168
    %v562 = vsel %vm561, %v556, %v558
    %v563 = vsel %vm561, %v558, %v560
    %v564 = vld [vmem:[%s4] sm:$0xf]
    %v565 = vld [vmem:[%s5] sm:$0xf]
    %567 = vset.pattern.permute.xlu0 0
    %568 = vperm.xlu0 %567, %v565
    %v569 = vpop.permute.xlu0 %568
    %572 = vrot.lane.b32.xlu0 %v538, 1
    %v573 = vpop.permute.xlu0 %572
    %574 = vrot.lane.b32.xlu0 %v539, 1
    %v575 = vpop.permute.xlu0 %574
    %576 = vrot.lane.b32.xlu0 %v540, 1
    %v577 = vpop.permute.xlu0 %576
    %578 = vrot.lane.b32.xlu0 %v547, 1
    %v579 = vpop.permute.xlu0 %578
    %580 = vrot.lane.b32.xlu0 %v551, 1
    %v581 = vpop.permute.xlu0 %580
    %582 = vrot.lane.b32.xlu0 %v549, 1
    %v583 = vpop.permute.xlu0 %582
    %584 = vrot.lane.b32.xlu0 %v556, 1
    %v585 = vpop.permute.xlu0 %584
    %586 = vrot.lane.b32.xlu0 %v562, 1
    %v587 = vpop.permute.xlu0 %586
    %588 = vrot.lane.b32.xlu0 %v563, 1
    %v589 = vpop.permute.xlu0 %588
    %vm590 = vcmask 7168
    %v591 = vsel %vm590, %v573, %v575
    %v592 = vsel %vm590, %v575, %v577
    %v593 = vsel %vm590, %v579, %v581
    %v594 = vsel %vm590, %v581, %v583
    %v595 = vsel %vm590, %v585, %v587
    %v596 = vsel %vm590, %v587, %v589
    %vm603 = vcmask 195584
    %v605 = vsel %vm603, %v564, 0
    %607 = vmatprep.subr.mxu0 %v592
    %608 = vmatpush1.msra.mxu0 %v591
    %609 = vmatprep.subr.mxu0 %v594
    %610 = vmatpush1.msra.mxu0 %v593
    %611 = vmatprep.subr.mxu0 %v596
    %612 = vmatpush1.msra.mxu0 %v595
    %613 = vmatprep.subr.mxu0 0.0
    %614 = vmatpush1.msra.mxu0 0.0
    %615 = vmatprep.subr.mxu0 0.0
    %616 = vmatpush1.msra.mxu0 0.0
    %617 = vmatprep.subr.mxu0 0.0
    %618 = vmatpush1.msra.mxu0 0.0
    %619 = vmatprep.subr.mxu0 0.0
    %620 = vmatpush1.msra.mxu0 0.0
    %621 = vmatprep.subr.mxu0 0.0
    %622 = vmatpush1.msra.mxu0 0.0
    %623 = vmatprep.subr.mxu0 0.0
    %624 = vmatpush1.msra.mxu0 0.0
    %625 = vmatprep.subr.mxu0 0.0
    %626 = vmatpush1.msra.mxu0 0.0
    %627 = vmatprep.subr.mxu0 0.0
    %628 = vmatpush1.msra.mxu0 0.0
    %629 = vmatprep.subr.mxu0 0.0
    %630 = vmatpush1.msra.mxu0 0.0
    %631 = vmatprep.subr.mxu0 0.0
    %632 = vmatpush1.msra.mxu0 0.0
    %633 = vmatprep.subr.mxu0 0.0
    %634 = vmatpush1.msra.mxu0 0.0
    %635 = vmatprep.subr.mxu0 0.0
    %636 = vmatpush1.msra.mxu0 0.0
    %637 = vmatprep.subr.mxu0 0.0
    %638 = vmatpush1.msra.mxu0 0.0
    %639 = vmatprep.subr.mxu0 0.0
    %640 = vmatpush1.msra.mxu0 0.0
    %641 = vmatprep.subr.mxu0 0.0
    %642 = vmatpush1.msra.mxu0 0.0
    %643 = vmatprep.subr.mxu0 0.0
    %644 = vmatpush1.msra.mxu0 0.0
    %645 = vmatprep.subr.mxu0 0.0
    %646 = vmatpush1.msra.mxu0 0.0
    %647 = vmatprep.subr.mxu0 0.0
    %648 = vmatpush1.msra.mxu0 0.0
    %649 = vmatprep.subr.mxu0 0.0
    %650 = vmatpush1.msra.mxu0 0.0
    %651 = vmatprep.subr.mxu0 0.0
    %652 = vmatpush1.msra.mxu0 0.0
    %653 = vmatprep.subr.mxu0 0.0
    %654 = vmatpush1.msra.mxu0 0.0
    %655 = vmatprep.subr.mxu0 0.0
    %656 = vmatpush1.msra.mxu0 0.0
    %657 = vmatprep.subr.mxu0 0.0
    %658 = vmatpush1.msra.mxu0 0.0
    %659 = vmatprep.subr.mxu0 0.0
    %660 = vmatpush1.msra.mxu0 0.0
    %661 = vmatprep.subr.mxu0 0.0
    %662 = vmatpush1.msra.mxu0 0.0
    %663 = vmatprep.subr.mxu0 0.0
    %664 = vmatpush1.msra.mxu0 0.0
    %665 = vmatprep.subr.mxu0 0.0
    %666 = vmatpush1.msra.mxu0 0.0
    %667 = vmatprep.subr.mxu0 0.0
    %668 = vmatpush1.msra.mxu0 0.0
    %669 = vmatprep.subr.mxu0 0.0
    %670 = vmatpush1.msra.mxu0 0.0
    %671 = vmatprep.mubr.f32.mxu0 0.0
    %672 = vmatmul.mubr.f32.gmra.mrb[0].mxu0 %v605
    %v673 = vpop.f32.mrb[0].mxu0
    %v674 = vadd.f32 %v569, %v673
    %v675 = vpop.f32.mrb[0].mxu0
    %v676 = vadd.f32 %v569, %v675
    %677 = vdwg.mxu0
    %vm678 = vcmp.lt.s32.totalorder %v354, 0
    %v679 = vsub.s32 0, %v354
    %v680 = vsel %vm678, %v679, %v354
    %v681 = vshrl.u32 %v680, 7
    %v682 = vand.u32 %v680, 127
    %v683 = vsub.s32 0, %v682
    %v684 = vsel %vm678, %v683, %v682
    %vm685 = vcmp.ne.s32.totalorder %v684, 0
    %vm686 = vcmp.lt.s32.totalorder %v684, 0
    %vm687 = vmand %vm686, %vm685
    %v688 = vadd.s32 %v684, 128
    %v689 = vsel %vm687, %v688, %v684
    %vm690 = vcmp.lt.s32.totalorder %v689, 16
    %v691 = vsel %vm429, 1, 0
    %v692 = vsel %vm690, 1, 0
    %v693 = vcvt.s32.f32 %v691
    %v694 = vcvt.s32.f32 %v692
    %v695 = vmul.f32 %v674, %v693
    %v696 = vmul.f32 %v676, %v694
    %vm697 = vcmask 1043456
    %v698 = vsel %vm697, %v695, 0.0
    %v699 = vsel %vm697, %v696, 0.0
    %v700 = vadd.f32 %v698, %v699
    %701 = vadd.xlane.f32.xlu0 %v700
    %v702 = vpop.xlane.xlu0 %701
    %v703 = vmul.f32 %v702, 0.03125
    %v704 = vsub.f32 %v674, %v703
    %v705 = vsub.f32 %v676, %v703
    %v706 = vmul.f32 %v704, %v704
    %v707 = vmul.f32 %v705, %v705
    %v708 = vmul.f32 %v706, %v693
    %v709 = vmul.f32 %v707, %v694
    %v710 = vsel %vm697, %v708, 0.0
    %v711 = vsel %vm697, %v709, 0.0
    %v712 = vadd.f32 %v710, %v711
    %713 = vadd.xlane.f32.xlu0 %v712
    %v714 = vpop.xlane.xlu0 %713
    %v715 = vmul.f32 %v714, 0.03125
    %v716 = vadd.f32 %v715, 1e-05
    %v717 = vrsqrt.pop %v716
    %v718 = vld [vmem:[%s6] sm:$0xf]
    %v719 = vmul.f32 %v717, %v718
    %721 = vset.pattern.permute.xlu0 0
    %722 = vperm.xlu0 %721, %v719
    %v723 = vpop.permute.xlu0 %722
    %v725 = vmul.f32 %v704, %v723
    %v726 = vmul.f32 %v705, %v723
    %v727 = vld [vmem:[%s7] sm:$0xf]
    %729 = vset.pattern.permute.xlu0 0
    %730 = vperm.xlu0 %729, %v727
    %v731 = vpop.permute.xlu0 %730
    %v733 = vadd.f32 %v725, %v731
    %v734 = vadd.f32 %v726, %v731
    %v735 = vmax.f32 %v733, 0.0
    %v736 = vmax.f32 %v734, 0.0
    %v737 = vmul.f32 %v735, %v693
    %v738 = vmul.f32 %v736, %v694
    %739 = vst [vmem:[#allocation3] sm:$0xf] 0.0
    %740 = vst [vmem:[#allocation3 + $0xc] sm:$0xf] 0.0
    %v743 = vcombine.low %v737, %v738
    %745 = vst [vmem:[#allocation3 + $0x4] sm:$0xff] %v743
    %v746 = vld [vmem:[%s8] sm:$0xf]
    %v747 = vld [vmem:[#allocation3] sm:$0xff]
    %v748 = vld [vmem:[#allocation3 + $0x8] sm:$0xf]
    %v749 = vld [vmem:[#allocation3 + $0x4] sm:$0xff]
    %751 = vrot.lane.b32.xlu0 %v746, 124
    %v752 = vpop.permute.xlu0 %751
    %v754 = vcombine.high %v749, %v749
    %vm755 = vcmask 31744
    %v756 = vsel %vm755, %v752, 0
    %v758 = vsel %vm697, %v749, 0
    %v760 = vsel %vm697, %v754, 0
    %762 = vmatprep.subr.mxu0 %v760
    %763 = vmatpush1.msra.mxu0 %v758
    %764 = vmatprep.subr.mxu0 0.0
    %765 = vmatpush1.msra.mxu0 0.0
    %766 = vmatprep.subr.mxu0 0.0
    %767 = vmatpush1.msra.mxu0 0.0
    %768 = vmatprep.subr.mxu0 0.0
    %769 = vmatpush1.msra.mxu0 0.0
    %770 = vmatprep.subr.mxu0 0.0
    %771 = vmatpush1.msra.mxu0 0.0
    %772 = vmatprep.subr.mxu0 0.0
    %773 = vmatpush1.msra.mxu0 0.0
    %774 = vmatprep.subr.mxu0 0.0
    %775 = vmatpush1.msra.mxu0 0.0
    %776 = vmatprep.subr.mxu0 0.0
    %777 = vmatpush1.msra.mxu0 0.0
    %778 = vmatprep.subr.mxu0 0.0
    %779 = vmatpush1.msra.mxu0 0.0
    %780 = vmatprep.subr.mxu0 0.0
    %781 = vmatpush1.msra.mxu0 0.0
    %782 = vmatprep.subr.mxu0 0.0
    %783 = vmatpush1.msra.mxu0 0.0
    %784 = vmatprep.subr.mxu0 0.0
    %785 = vmatpush1.msra.mxu0 0.0
    %786 = vmatprep.subr.mxu0 0.0
    %787 = vmatpush1.msra.mxu0 0.0
    %788 = vmatprep.subr.mxu0 0.0
    %789 = vmatpush1.msra.mxu0 0.0
    %790 = vmatprep.subr.mxu0 0.0
    %791 = vmatpush1.msra.mxu0 0.0
    %792 = vmatprep.subr.mxu0 0.0
    %793 = vmatpush1.msra.mxu0 0.0
    %794 = vmatprep.subr.mxu0 0.0
    %795 = vmatpush1.msra.mxu0 0.0
    %796 = vmatprep.subr.mxu0 0.0
    %797 = vmatpush1.msra.mxu0 0.0
    %798 = vmatprep.subr.mxu0 0.0
    %799 = vmatpush1.msra.mxu0 0.0
    %800 = vmatprep.subr.mxu0 0.0
    %801 = vmatpush1.msra.mxu0 0.0
    %802 = vmatprep.subr.mxu0 0.0
    %803 = vmatpush1.msra.mxu0 0.0
    %804 = vmatprep.subr.mxu0 0.0
    %805 = vmatpush1.msra.mxu0 0.0
    %806 = vmatprep.subr.mxu0 0.0
    %807 = vmatpush1.msra.mxu0 0.0
    %808 = vmatprep.subr.mxu0 0.0
    %809 = vmatpush1.msra.mxu0 0.0
    %810 = vmatprep.subr.mxu0 0.0
    %811 = vmatpush1.msra.mxu0 0.0
    %812 = vmatprep.subr.mxu0 0.0
    %813 = vmatpush1.msra.mxu0 0.0
    %814 = vmatprep.subr.mxu0 0.0
    %815 = vmatpush1.msra.mxu0 0.0
    %816 = vmatprep.subr.mxu0 0.0
    %817 = vmatpush1.msra.mxu0 0.0
    %818 = vmatprep.subr.mxu0 0.0
    %819 = vmatpush1.msra.mxu0 0.0
    %820 = vmatprep.subr.mxu0 0.0
    %821 = vmatpush1.msra.mxu0 0.0
    %822 = vmatprep.subr.mxu0 0.0
    %823 = vmatpush1.msra.mxu0 0.0
    %824 = vmatprep.subr.mxu0 0.0
    %825 = vmatpush1.msra.mxu0 0.0
    %826 = vmatprep.mubr.f32.mxu0 0.0
    %827 = vmatmul.mubr.f32.gmra.mrb[0].mxu0 %v756
    %v828 = vpop.f32.mrb[0].mxu0
    %v829 = vadd.f32 0.0, %v828
    %v830 = vpop.f32.mrb[0].mxu0
    %v831 = vadd.f32 0.0, %v830
    %832 = vdwg.mxu0
    %v835 = vcombine.high %v747, %v747
    %836 = vrot.lane.b32.xlu0 %v747, 1
    %v837 = vpop.permute.xlu0 %836
    %838 = vrot.lane.b32.xlu0 %v835, 1
    %v839 = vpop.permute.xlu0 %838
    %840 = vrot.lane.b32.xlu0 %v748, 1
    %v841 = vpop.permute.xlu0 %840
    %v842 = vsel %vm590, %v837, %v839
    %v843 = vsel %vm590, %v839, %v841
    %v844 = vsel %vm755, %v746, 0
    %v846 = vsel %vm697, %v842, 0
    %v848 = vsel %vm697, %v843, 0
    %850 = vmatprep.subr.mxu0 %v848
    %851 = vmatpush1.msra.mxu0 %v846
    %852 = vmatprep.subr.mxu0 0.0
    %853 = vmatpush1.msra.mxu0 0.0
    %854 = vmatprep.subr.mxu0 0.0
    %855 = vmatpush1.msra.mxu0 0.0
    %856 = vmatprep.subr.mxu0 0.0
    %857 = vmatpush1.msra.mxu0 0.0
    %858 = vmatprep.subr.mxu0 0.0
    %859 = vmatpush1.msra.mxu0 0.0
    %860 = vmatprep.subr.mxu0 0.0
    %861 = vmatpush1.msra.mxu0 0.0
    %862 = vmatprep.subr.mxu0 0.0
    %863 = vmatpush1.msra.mxu0 0.0
    %864 = vmatprep.subr.mxu0 0.0
    %865 = vmatpush1.msra.mxu0 0.0
    %866 = vmatprep.subr.mxu0 0.0
    %867 = vmatpush1.msra.mxu0 0.0
    %868 = vmatprep.subr.mxu0 0.0
    %869 = vmatpush1.msra.mxu0 0.0
    %870 = vmatprep.subr.mxu0 0.0
    %871 = vmatpush1.msra.mxu0 0.0
    %872 = vmatprep.subr.mxu0 0.0
    %873 = vmatpush1.msra.mxu0 0.0
    %874 = vmatprep.subr.mxu0 0.0
    %875 = vmatpush1.msra.mxu0 0.0
    %876 = vmatprep.subr.mxu0 0.0
    %877 = vmatpush1.msra.mxu0 0.0
    %878 = vmatprep.subr.mxu0 0.0
    %879 = vmatpush1.msra.mxu0 0.0
    %880 = vmatprep.subr.mxu0 0.0
    %881 = vmatpush1.msra.mxu0 0.0
    %882 = vmatprep.subr.mxu0 0.0
    %883 = vmatpush1.msra.mxu0 0.0
    %884 = vmatprep.subr.mxu0 0.0
    %885 = vmatpush1.msra.mxu0 0.0
    %886 = vmatprep.subr.mxu0 0.0
    %887 = vmatpush1.msra.mxu0 0.0
    %888 = vmatprep.subr.mxu0 0.0
    %889 = vmatpush1.msra.mxu0 0.0
    %890 = vmatprep.subr.mxu0 0.0
    %891 = vmatpush1.msra.mxu0 0.0
    %892 = vmatprep.subr.mxu0 0.0
    %893 = vmatpush1.msra.mxu0 0.0
    %894 = vmatprep.subr.mxu0 0.0
    %895 = vmatpush1.msra.mxu0 0.0
    %896 = vmatprep.subr.mxu0 0.0
    %897 = vmatpush1.msra.mxu0 0.0
    %898 = vmatprep.subr.mxu0 0.0
    %899 = vmatpush1.msra.mxu0 0.0
    %900 = vmatprep.subr.mxu0 0.0
    %901 = vmatpush1.msra.mxu0 0.0
    %902 = vmatprep.subr.mxu0 0.0
    %903 = vmatpush1.msra.mxu0 0.0
    %904 = vmatprep.subr.mxu0 0.0
    %905 = vmatpush1.msra.mxu0 0.0
    %906 = vmatprep.subr.mxu0 0.0
    %907 = vmatpush1.msra.mxu0 0.0
    %908 = vmatprep.subr.mxu0 0.0
    %909 = vmatpush1.msra.mxu0 0.0
    %910 = vmatprep.subr.mxu0 0.0
    %911 = vmatpush1.msra.mxu0 0.0
    %912 = vmatprep.subr.mxu0 0.0
    %913 = vmatpush1.msra.mxu0 0.0
    %914 = vmatprep.mubr.f32.mxu0 0.0
    %915 = vmatmul.mubr.f32.gmra.mrb[0].mxu0 %v844
    %v916 = vpop.f32.mrb[0].mxu0
    %v917 = vadd.f32 %v829, %v916
    %v918 = vpop.f32.mrb[0].mxu0
    %v919 = vadd.f32 %v831, %v918
    %920 = vdwg.mxu0
    %v921 = vld [vmem:[%s8] sm:$0xf]
    %v922 = vld [vmem:[#allocation3 + $0x4] sm:$0xff]
    %v923 = vld [vmem:[#allocation3 + $0xc] sm:$0xf]
    %925 = vrot.lane.b32.xlu0 %v921, 120
    %v926 = vpop.permute.xlu0 %925
    %v929 = vcombine.high %v922, %v922
    %930 = vrot.lane.b32.xlu0 %v922, 127
    %v931 = vpop.permute.xlu0 %930
    %932 = vrot.lane.b32.xlu0 %v929, 127
    %v933 = vpop.permute.xlu0 %932
    %934 = vrot.lane.b32.xlu0 %v923, 127
    %v935 = vpop.permute.xlu0 %934
    %v936 = vsel %vm550, %v931, %v933
    %v937 = vsel %vm550, %v933, %v935
    %v938 = vsel %vm755, %v926, 0
    %v940 = vsel %vm697, %v936, 0
    %v942 = vsel %vm697, %v937, 0
    %944 = vmatprep.subr.mxu0 %v942
    %945 = vmatpush1.msra.mxu0 %v940
    %946 = vmatprep.subr.mxu0 0.0
    %947 = vmatpush1.msra.mxu0 0.0
    %948 = vmatprep.subr.mxu0 0.0
    %949 = vmatpush1.msra.mxu0 0.0
    %950 = vmatprep.subr.mxu0 0.0
    %951 = vmatpush1.msra.mxu0 0.0
    %952 = vmatprep.subr.mxu0 0.0
    %953 = vmatpush1.msra.mxu0 0.0
    %954 = vmatprep.subr.mxu0 0.0
    %955 = vmatpush1.msra.mxu0 0.0
    %956 = vmatprep.subr.mxu0 0.0
    %957 = vmatpush1.msra.mxu0 0.0
    %958 = vmatprep.subr.mxu0 0.0
    %959 = vmatpush1.msra.mxu0 0.0
    %960 = vmatprep.subr.mxu0 0.0
    %961 = vmatpush1.msra.mxu0 0.0
    %962 = vmatprep.subr.mxu0 0.0
    %963 = vmatpush1.msra.mxu0 0.0
    %964 = vmatprep.subr.mxu0 0.0
    %965 = vmatpush1.msra.mxu0 0.0
    %966 = vmatprep.subr.mxu0 0.0
    %967 = vmatpush1.msra.mxu0 0.0
    %968 = vmatprep.subr.mxu0 0.0
    %969 = vmatpush1.msra.mxu0 0.0
    %970 = vmatprep.subr.mxu0 0.0
    %971 = vmatpush1.msra.mxu0 0.0
    %972 = vmatprep.subr.mxu0 0.0
    %973 = vmatpush1.msra.mxu0 0.0
    %974 = vmatprep.subr.mxu0 0.0
    %975 = vmatpush1.msra.mxu0 0.0
    %976 = vmatprep.subr.mxu0 0.0
    %977 = vmatpush1.msra.mxu0 0.0
    %978 = vmatprep.subr.mxu0 0.0
    %979 = vmatpush1.msra.mxu0 0.0
    %980 = vmatprep.subr.mxu0 0.0
    %981 = vmatpush1.msra.mxu0 0.0
    %982 = vmatprep.subr.mxu0 0.0
    %983 = vmatpush1.msra.mxu0 0.0
    %984 = vmatprep.subr.mxu0 0.0
    %985 = vmatpush1.msra.mxu0 0.0
    %986 = vmatprep.subr.mxu0 0.0
    %987 = vmatpush1.msra.mxu0 0.0
    %988 = vmatprep.subr.mxu0 0.0
    %989 = vmatpush1.msra.mxu0 0.0
    %990 = vmatprep.subr.mxu0 0.0
    %991 = vmatpush1.msra.mxu0 0.0
    %992 = vmatprep.subr.mxu0 0.0
    %993 = vmatpush1.msra.mxu0 0.0
    %994 = vmatprep.subr.mxu0 0.0
    %995 = vmatpush1.msra.mxu0 0.0
    %996 = vmatprep.subr.mxu0 0.0
    %997 = vmatpush1.msra.mxu0 0.0
    %998 = vmatprep.subr.mxu0 0.0
    %999 = vmatpush1.msra.mxu0 0.0
    %1000 = vmatprep.subr.mxu0 0.0
    %1001 = vmatpush1.msra.mxu0 0.0
    %1002 = vmatprep.subr.mxu0 0.0
    %1003 = vmatpush1.msra.mxu0 0.0
    %1004 = vmatprep.subr.mxu0 0.0
    %1005 = vmatpush1.msra.mxu0 0.0
    %1006 = vmatprep.subr.mxu0 0.0
    %1007 = vmatpush1.msra.mxu0 0.0
    %1008 = vmatprep.mubr.f32.mxu0 0.0
    %1009 = vmatmul.mubr.f32.gmra.mrb[0].mxu0 %v938
    %v1010 = vpop.f32.mrb[0].mxu0
    %v1011 = vadd.f32 0.0, %v1010
    %v1012 = vpop.f32.mrb[0].mxu0
    %v1013 = vadd.f32 0.0, %v1012
    %1014 = vdwg.mxu0
    %v1015 = vadd.f32 %v917, %v1011
    %v1016 = vadd.f32 %v919, %v1013
    %v1017 = vld [vmem:[%s9] sm:$0xf]
    %1019 = vset.pattern.permute.xlu0 0
    %1020 = vperm.xlu0 %1019, %v1017
    %v1021 = vpop.permute.xlu0 %1020
    %v1023 = vadd.f32 %v1015, %v1021
    %v1024 = vadd.f32 %v1016, %v1021
    %v1025 = vmul.f32 %v1023, %v693
    %v1026 = vmul.f32 %v1024, %v694
    %v1027 = vsel %vm697, %v1025, 0.0
    %v1028 = vsel %vm697, %v1026, 0.0
    %v1029 = vadd.f32 %v1027, %v1028
    %1030 = vadd.xlane.f32.xlu0 %v1029
    %v1031 = vpop.xlane.xlu0 %1030
    %v1032 = vmul.f32 %v1031, 0.03125
    %v1033 = vsub.f32 %v1023, %v1032
    %v1034 = vsub.f32 %v1024, %v1032
    %v1035 = vmul.f32 %v1033, %v1033
    %v1036 = vmul.f32 %v1034, %v1034
    %v1037 = vmul.f32 %v1035, %v693
    %v1038 = vmul.f32 %v1036, %v694
    %v1039 = vsel %vm697, %v1037, 0.0
    %v1040 = vsel %vm697, %v1038, 0.0
    %v1041 = vadd.f32 %v1039, %v1040
    %1042 = vadd.xlane.f32.xlu0 %v1041
    %v1043 = vpop.xlane.xlu0 %1042
    %v1044 = vmul.f32 %v1043, 0.03125
    %v1045 = vadd.f32 %v1044, 1e-05
    %v1046 = vrsqrt.pop %v1045
    %v1047 = vld [vmem:[%s10] sm:$0xf]
    %v1048 = vmul.f32 %v1046, %v1047
    %1050 = vset.pattern.permute.xlu0 0
    %1051 = vperm.xlu0 %1050, %v1048
    %v1052 = vpop.permute.xlu0 %1051
    %v1054 = vmul.f32 %v1033, %v1052
    %v1055 = vmul.f32 %v1034, %v1052
    %v1056 = vld [vmem:[%s11] sm:$0xf]
    %1058 = vset.pattern.permute.xlu0 0
    %1059 = vperm.xlu0 %1058, %v1056
    %v1060 = vpop.permute.xlu0 %1059
    %v1062 = vadd.f32 %v1054, %v1060
    %v1063 = vadd.f32 %v1055, %v1060
    %v1064 = vmax.f32 %v1062, 0.0
    %v1065 = vmax.f32 %v1063, 0.0
    %v1066 = vmul.f32 %v1064, %v693
    %v1067 = vmul.f32 %v1065, %v694
    %v1070 = vcombine.low %v1066, %v1067
    %1072 = vst [vmem:[#allocation7] sm:$0xff] %v1070
    // Predicated region
    $region54: #{tpu_custom_call.1} parent=1 // pred_check
      _
    $region55: #{tpu_custom_call.1} parent=1 // pred_check_branch
      %1074 = sbr.rel (0) target = $region57
    $region56: #{tpu_custom_call.1} parent=1 // pred_region
      %s1076 = ssub.s32 128, 128
      %1077 = vsyncadd [#allocation6], %s1076
      %s1079 = sshll.u32 [#allocation7], 4
      %s1080 = int_to_ptr.vmem [resolvable:$true] %s1079
      %1082 = dma.vmem_to_hbm [thread:$0]  %s1080, 128, %s12, [#allocation6]
    $region57: #{tpu_custom_call.1} parent=1 // pred_fallthru
      _
    // Predicated region
    $region58: #{tpu_custom_call.1} parent=1 // pred_check
      _
    $region59: #{tpu_custom_call.1} parent=1 // pred_check_branch
      %1084 = sbr.rel (0) target = $region61
    $region60: #{tpu_custom_call.1} parent=1 // pred_region
      %1085 = dma.done [#allocation6], 128
    $region61: #{tpu_custom_call.1} parent=1 // pred_fallthru
      _
    %1086 = vsyncpa [#allocation5], 1
    %1087 = vsyncpa [#allocation6], 1

</llo_original>
